<compile_context>
chip_gen: v5e
topology: v5e:2x2
jax: 0.10.0
libtpu: 0.0.40
codegen_flags: <defaults>
</compile_context>

<pallas_src>
import functools

import numpy as np
import jax
import jax.numpy as jnp
from jax.experimental import pallas as pl
from jax.experimental.pallas import tpu as pltpu


def _full_specs(args):
    """Whole-array BlockSpecs for a grid=(1,) pallas_call."""
    return [pl.BlockSpec(a.shape, lambda i, nd=a.ndim: (0,) * nd) for a in args]


# ----------------------------------------------------------------------------
# Kernel 1: Conv2d(3->16, k3, s2, p1) + ReLU + MaxPool2d(2,2), fused.
# ----------------------------------------------------------------------------
def _conv1_kernel(p, w, b, o, *, n_off):
    """o = relu(maxpool(conv)+b): one matmul over the lane-concatenated
    pool-offset patches, then an elementwise max over 512-lane slices.
    (max(x_i)+b == max(x_i+b); relu(max) == max(relu) -- both monotone.)"""
    y = jnp.dot(w[...], p[...], preferred_element_type=jnp.float32)  # (16, 4*N)
    n = y.shape[1] // n_off
    m = y[:, :n]
    for i in range(1, n_off):
        m = jnp.maximum(m, y[:, i * n:(i + 1) * n])
    o[...] = jnp.maximum(m + b[...], 0.0)


def conv1_pooled_patches(x, k=3, pad=1, stride=2):
    """im2col for Conv2d(k3,s2,p1) merged with the following MaxPool2d(2,2):
    the four pool-offset patch matrices (C*k*k, B*Po*Qo) concatenated on lanes."""
    B, C, H, W = x.shape
    xp = jnp.pad(x, ((0, 0), (0, 0), (pad, pad), (pad, pad)))
    Ho = (H + 2 * pad - k) // stride + 1
    Wo = (W + 2 * pad - k) // stride + 1
    Po, Qo = Ho // 2, Wo // 2
    step = 2 * stride                                   # conv stride * pool stride
    mats = []
    for s in range(2):
        for t in range(2):
            taps = [xp[:, :,
                       stride * s + di: stride * s + di + step * (Po - 1) + 1: step,
                       stride * t + dj: stride * t + dj + step * (Qo - 1) + 1: step]
                    for di in range(k) for dj in range(k)]
            p = jnp.stack(taps, axis=2)                 # (B, C, k*k, Po, Qo)
            mats.append(p.transpose(1, 2, 0, 3, 4).reshape(C * k * k, B * Po * Qo))
    return jnp.concatenate(mats, axis=1), Po, Qo


def conv1_call(poster, w, b):
    """Returns conv1 output in channel-first (16, B*16*16) layout (lane-dense)."""
    B = poster.shape[0]
    pcat, Po, Qo = conv1_pooled_patches(poster)
    Cout, K = w.shape[0], w.shape[1] * 9
    N = B * Po * Qo
    args = [pcat.astype(jnp.bfloat16),
            w.reshape(Cout, K).astype(jnp.bfloat16),
            b.reshape(Cout, 1).astype(jnp.float32)]
    return pl.pallas_call(
        functools.partial(_conv1_kernel, n_off=4),
        out_shape=jax.ShapeDtypeStruct((Cout, N), jnp.float32),
        grid=(1,),
        in_specs=_full_specs(args),
        out_specs=pl.BlockSpec((Cout, N), lambda i: (0, 0)),
        compiler_params=pltpu.CompilerParams(dimension_semantics=("arbitrary",)),
        cost_estimate=pl.CostEstimate(
            flops=2 * Cout * K * 4 * N, transcendentals=0,
            bytes_accessed=2 * K * 4 * N + 2 * Cout * K + 4 * Cout * N),
    )(*args)


# ----------------------------------------------------------------------------
# Host-side glue feeding the fused head kernel.
# ----------------------------------------------------------------------------
def conv2_pooled_patches_T(x1_2d, B, H=16, W=16, k=3, pad=1, stride=2):
    """Pooled-conv im2col for conv2 taken directly from conv1's (C, B*H*W)
    layout (no NCHW round trip).  Returns (4*B*Po*Qo, C*k*k): rows grouped as
    (pool_offset, b, po, qo), cols = (c, tap)."""
    C = x1_2d.shape[0]
    x1 = x1_2d.reshape(C, B, H, W)
    xp = jnp.pad(x1, ((0, 0), (0, 0), (pad, pad), (pad, pad)))
    Ho = (H + 2 * pad - k) // stride + 1
    Wo = (W + 2 * pad - k) // stride + 1
    Po, Qo = Ho // 2, Wo // 2
    step = 2 * stride
    rows = []
    for s in range(2):
        for t in range(2):
            taps = [xp[:, :,
                       stride * s + di: stride * s + di + step * (Po - 1) + 1: step,
                       stride * t + dj: stride * t + dj + step * (Qo - 1) + 1: step]
                    for di in range(k) for dj in range(k)]
            p = jnp.stack(taps, axis=1)                 # (C, k*k, B, Po, Qo)
            rows.append(p.transpose(2, 3, 4, 0, 1).reshape(B * Po * Qo, C * k * k))
    return jnp.concatenate(rows, axis=0), Po, Qo


def conv3_selector(B):
    """0/1 matrix (9*4B, 16B): row (tap, b, ho, wo) picks the conv3(k3,s2,p1)
    input column (b, hi, wi) of the 4x4 x2 map; all-zero rows where the tap
    falls in the zero padding.  Built once host-side as a constant."""
    S = np.zeros((9 * 4 * B, 16 * B), np.float32)
    for di in range(3):
        for dj in range(3):
            t = di * 3 + dj
            for b in range(B):
                for ho in range(2):
                    for wo in range(2):
                        hi, wi = 2 * ho + di - 1, 2 * wo + dj - 1
                        if 0 <= hi < 4 and 0 <= wi < 4:
                            S[t * 4 * B + b * 4 + ho * 2 + wo,
                              b * 16 + hi * 4 + wi] = 1.0
    return S


# ----------------------------------------------------------------------------
# Kernel 2: fused head -- conv2 + conv3 tail + attention + fusion + towers.
# ----------------------------------------------------------------------------
def _head_kernel(pcat2, w2, b2, s3, w3s, b3, apool, ugaj, wt, bt, wpack, bpack,
                 out, *, B, offs):
    f32, bf = jnp.float32, jnp.bfloat16
    mm = lambda a, b: jnp.dot(a, b, preferred_element_type=f32)
    relu = lambda t: jnp.maximum(t, 0.0)
    wp = lambda i: wpack[offs[i][0]:offs[i][1], :]
    bp = lambda i: bpack[i:i + 1, :]
    nsp, no = 16 * B, 4 * B

    # conv2(16->32,k3,s2,p1)+ReLU+MaxPool2x2: one matmul over the row-stacked
    # pool-offset patches, pool-max over sublane-aligned row blocks.
    y2 = mm(pcat2[...], w2[...])                        # (4*nsp, 32)
    m = y2[:nsp]
    for off in range(1, 4):
        m = jnp.maximum(m, y2[off * nsp:(off + 1) * nsp])
    x2 = relu(m + b2[...]).astype(bf)                   # (nsp, 32): rows (b,po,qo)

    # conv3(32->64,k3,s2,p1)+ReLU+AdaptiveAvgPool2d((1,1)): exact 0/1 tap
    # selection (zero-padded im2col) as a matmul, then 9 per-tap matmuls with
    # sublane-aligned slices, then bias+relu and the 4-way average.
    xsel = mm(s3[...], x2).astype(bf)                   # (9*no, 32)
    acc = mm(xsel[:no], w3s[:32])
    for t in range(1, 9):
        acc = acc + mm(xsel[t * no:(t + 1) * no], w3s[t * 32:(t + 1) * 32])
    y3 = relu(acc + b3[...])                            # (no, 64)
    pooled = mm(apool[...], y3)                         # (B, 64)

    # poster Linear -> folded single-key cross-attention -> fusion MLP.
    p_feat = mm(pooled.astype(bf), wp(0)) + bp(0)       # (B, E)
    attn = mm(p_feat.astype(bf), wp(1)) + bp(1)         # out_proj(v_proj(poster))
    f1 = relu(mm(attn.astype(bf), wp(2)) + mm(p_feat.astype(bf), wp(3)) + bp(2))
    f2 = relu(mm(f1.astype(bf), wp(4)) + bp(3))
    # dropout(p=0.5): identity at inference.

    # user tower: 4 (Linear+ReLU) as one block-diagonal matmul -> (B, 4E).
    towers = relu(mm(ugaj[...], wt[...]) + bt[...])
    movie_f = jnp.tanh(mm(f2.astype(bf), wp(5)) + bp(4))
    user_f = jnp.tanh(mm(towers.astype(bf), wp(6)) + bp(5))
    out[...] = jnp.sum(user_f * movie_f, axis=1, keepdims=True)


def head_call(params, ugaj, pcat2, B, E):
    f32, bf = jnp.float32, jnp.bfloat16
    E2 = E // 2

    w2 = params["pc2_w"].reshape(params["pc2_w"].shape[0], -1).T.astype(bf)  # (144,32)
    b2 = params["pc2_b"].reshape(1, -1).astype(f32)
    s3 = jnp.asarray(conv3_selector(B), dtype=bf)                            # (9*4B,16B)
    w3 = params["pc3_w"]                                                     # (64,32,3,3)
    w3s = jnp.concatenate([w3[:, :, di, dj].T
                           for di in range(3) for dj in range(3)],
                          axis=0).astype(bf)                                 # (288, 64)
    b3 = params["pc3_b"].reshape(1, -1).astype(f32)
    apool = jnp.repeat(jnp.eye(B, dtype=f32), 4, axis=1) / 4.0               # (B, 4B)

    w_plin, b_plin = params["plin_w"].T, params["plin_b"].reshape(1, E)

    # PyTorch MultiheadAttention: with a single key/value token softmax == 1,
    # so attn = out_proj(v_proj(poster)); fold the two linears (exact algebra).
    in_w, in_b = params["attn_in_w"], params["attn_in_b"]
    wv, bv = in_w[2 * E:].T, in_b[2 * E:].reshape(1, E)
    wo, bo = params["attn_out_w"].T, params["attn_out_b"].reshape(1, E)
    w_attn, b_attn = wv @ wo, bv @ wo + bo

    f1w = params["f1_w"]                                                     # (E, 2E)
    w_f1a, w_f1b, b_f1 = f1w[:, :E].T, f1w[:, E:].T, params["f1_b"].reshape(1, E)
    w_f2, b_f2 = params["f2_w"].T, params["f2_b"].reshape(1, E)
    w_mf, b_mf = params["movie_final_w"].T, params["movie_final_b"].reshape(1, E)
    w_uf, b_uf = params["user_final_w"].T, params["user_final_b"].reshape(1, E)

    # Pack all E-column weights / biases in matching order:
    # plin, attn, f1a, f1b, f2, movie_final, user_final.
    blocks = [w_plin, w_attn, w_f1a, w_f1b, w_f2, w_mf, w_uf]
    wpack = jnp.concatenate(blocks, axis=0).astype(bf)                       # (352, E)
    offs, start = [], 0
    for blk in blocks:
        offs.append((start, start + blk.shape[0]))
        start += blk.shape[0]
    bpack = jnp.concatenate([b_plin, b_attn, b_f1, b_f2, b_mf, b_uf],
                            axis=0).astype(f32)                              # (6, E)

    # user/gender/age/job towers packed block-diagonally: (E + 3*E/2, 4E).
    wt = jnp.zeros((E + 3 * E2, 4 * E), dtype=f32)
    wt = wt.at[0:E, 0:E].set(params["user_fc_w"].T)
    wt = wt.at[E:E + E2, E:2 * E].set(params["gender_fc_w"].T)
    wt = wt.at[E + E2:E + 2 * E2, 2 * E:3 * E].set(params["age_fc_w"].T)
    wt = wt.at[E + 2 * E2:, 3 * E:].set(params["job_fc_w"].T)
    bt = jnp.concatenate([params["user_fc_b"], params["gender_fc_b"],
                          params["age_fc_b"], params["job_fc_b"]]).reshape(1, 4 * E)

    args = [pcat2.astype(bf), w2, b2, s3, w3s, b3, apool,
            ugaj.astype(bf), wt.astype(bf), bt.astype(f32), wpack, bpack]
    return pl.pallas_call(
        functools.partial(_head_kernel, B=B, offs=tuple(offs)),
        out_shape=jax.ShapeDtypeStruct((B, 1), jnp.float32),
        grid=(1,),
        in_specs=_full_specs(args),
        out_specs=pl.BlockSpec((B, 1), lambda i: (0, 0)),
        compiler_params=pltpu.CompilerParams(dimension_semantics=("arbitrary",)),
    )(*args)


# ----------------------------------------------------------------------------
# Parameter init (deterministic, synthetic) and full forward pass.
# ----------------------------------------------------------------------------
def init_params(key, n_users, n_movies, n_genders, n_ages, n_jobs,
                n_categories, n_titles, embed_dim=32):
    E, E2 = embed_dim, embed_dim // 2
    keys = iter(jax.random.split(key, 64))

    def w(shape, scale=0.05):
        return scale * jax.random.normal(next(keys), shape, dtype=jnp.float32)

    p = {}
    p["user_emb"] = w((n_users, E))
    p["gender_emb"] = w((n_genders, E2))
    p["age_emb"] = w((n_ages, E2))
    p["job_emb"] = w((n_jobs, E2))
    p["movie_emb"] = w((n_movies, E))
    p["cat_emb"] = w((n_categories, E))
    p["title_emb"] = w((n_titles, E))
    # poster encoder
    p["pc1_w"], p["pc1_b"] = w((16, 3, 3, 3)), w((16,))
    p["pc2_w"], p["pc2_b"] = w((32, 16, 3, 3)), w((32,))
    p["pc3_w"], p["pc3_b"] = w((64, 32, 3, 3)), w((64,))
    p["plin_w"], p["plin_b"] = w((E, 64)), w((E,))
    # title text-CNN (kept for fidelity; provably does not affect the output)
    for k in (2, 3, 4, 5):
        p[f"tc{k}_w"], p[f"tc{k}_b"] = w((8, E, k)), w((8,))
    p["title_fc_w"], p["title_fc_b"] = w((E, 32)), w((E,))
    # cross attention (PyTorch in_proj layout)
    p["attn_in_w"], p["attn_in_b"] = w((3 * E, E)), w((3 * E,))
    p["attn_out_w"], p["attn_out_b"] = w((E, E)), w((E,))
    # fusion
    p["f1_w"], p["f1_b"] = w((E, 2 * E)), w((E,))
    p["f2_w"], p["f2_b"] = w((E, E)), w((E,))
    # user tower (movie_fc / category_fc exist in __init__ but are unused in forward)
    p["user_fc_w"], p["user_fc_b"] = w((E, E)), w((E,))
    p["gender_fc_w"], p["gender_fc_b"] = w((E, E2)), w((E,))
    p["age_fc_w"], p["age_fc_b"] = w((E, E2)), w((E,))
    p["job_fc_w"], p["job_fc_b"] = w((E, E2)), w((E,))
    p["user_final_w"], p["user_final_b"] = w((E, 4 * E)), w((E,))
    p["movie_final_w"], p["movie_final_b"] = w((E, E)), w((E,))
    return p


def forward(params, user_id, movie_id, gender, age, job_id,
            movie_categories, movie_titles, poster_img, embed_dim=32):
    # NOTE: movie_combined = movie_emb + category_emb + title_features only
    # feeds the cross-attention *query*.  Key/value have seq_len == 1, so the
    # softmax over the single key is identically 1 and attn_output does not
    # depend on the query: that whole path (movie/category/title embeddings
    # and the title text-CNN) is dead code and is elided -- the prediction is
    # identical to the reference forward.
    del movie_id, movie_categories, movie_titles
    E = embed_dim
    B = user_id.shape[0]

    # --- user-tower embedding gathers (XLA glue) ---
    ugaj = jnp.concatenate([params["user_emb"][user_id],
                            params["gender_emb"][gender],
                            params["age_emb"][age],
                            params["job_emb"][job_id]], axis=1)   # (B, E + 3E/2)

    # --- poster encoder: conv1 kernel, then everything else in the head ---
    x1_2d = conv1_call(poster_img, params["pc1_w"], params["pc1_b"])  # (16, B*256)
    pcat2, _, _ = conv2_pooled_patches_T(x1_2d, B)                    # (4*B*16, 144)

    # --- fused head: conv2 + conv3 tail + attention + fusion + towers + dot ---
    return head_call(params, ugaj, pcat2, B, E)


if __name__ == "__main__":
    key = jax.random.PRNGKey(0)
    E, B, T = 32, 2, 15
    n_users, n_movies, n_genders, n_ages, n_jobs = 10, 20, 2, 7, 21
    n_categories, n_titles = 19, 50

    pkey, dkey = jax.random.split(key)
    params = init_params(pkey, n_users, n_movies, n_genders, n_ages, n_jobs,
                         n_categories, n_titles, embed_dim=E)

    dkeys = jax.random.split(dkey, 8)
    user_id = jax.random.randint(dkeys[0], (B,), 0, n_users)
    movie_id = jax.random.randint(dkeys[1], (B,), 0, n_movies)
    gender = jax.random.randint(dkeys[2], (B,), 0, n_genders)
    age = jax.random.randint(dkeys[3], (B,), 0, n_ages)
    job_id = jax.random.randint(dkeys[4], (B,), 0, n_jobs)
    movie_categories = jax.random.randint(dkeys[5], (B, 3), 0, n_categories)
    movie_titles = jax.random.randint(dkeys[6], (B, T), 0, n_titles)
    poster_img = jax.random.normal(dkeys[7], (B, 3, 64, 64), dtype=jnp.float32)

    fwd = jax.jit(functools.partial(forward, embed_dim=E))
    pred = fwd(params, user_id, movie_id, gender, age, job_id,
               movie_categories, movie_titles, poster_img)
    pred = jax.block_until_ready(pred)
    assert pred.shape == (B, 1) and pred.dtype == jnp.float32
    print("KERNEL_OK")
</pallas_src>

<mosaic_0001>
module attributes {stable_mosaic.version = 11 : i64} {
  func.func @_conv1_kernel(%arg0: i32, %arg1: memref<27x2048xbf16, #tpu.memory_space<vmem>>, %arg2: memref<16x27xbf16, #tpu.memory_space<vmem>>, %arg3: memref<16x1xf32, #tpu.memory_space<vmem>>, %arg4: memref<16x512xf32, #tpu.memory_space<vmem>>) attributes {dimension_semantics = [#tpu.dimension_semantics<arbitrary>], iteration_bounds = array<i64: 1>, scalar_prefetch = 0 : i64, scratch_operands = 0 : i64, tpu.core_type = #tpu.core_type<tc>, window_params = [{pipeline_mode = #tpu.pipeline_mode<synchronous>, transform_indices = @transform_0, window_bounds = array<i64: 27, 2048>}, {pipeline_mode = #tpu.pipeline_mode<synchronous>, transform_indices = @transform_1, window_bounds = array<i64: 16, 27>}, {pipeline_mode = #tpu.pipeline_mode<synchronous>, transform_indices = @transform_2, window_bounds = array<i64: 16, 1>}, {pipeline_mode = #tpu.pipeline_mode<synchronous>, transform_indices = @transform_3, window_bounds = array<i64: 16, 512>}]} {
    %c0 = arith.constant 0 : index
    %c0_0 = arith.constant 0 : index
    %0 = vector.load %arg2[%c0, %c0_0] : memref<16x27xbf16, #tpu.memory_space<vmem>>, vector<16x27xbf16>
    %c0_1 = arith.constant 0 : index
    %c0_2 = arith.constant 0 : index
    %1 = vector.load %arg1[%c0_1, %c0_2] : memref<27x2048xbf16, #tpu.memory_space<vmem>>, vector<27x2048xbf16>
    %cst = arith.constant dense<0.000000e+00> : vector<16x2048xf32>
    %2 = tpu.matmul %0, %1, %cst {dimension_numbers = #tpu.dot_dimension_numbers<[1], [0], [0], [1], [0, 0, 1, 1], [], []>} : vector<16x27xbf16>, vector<27x2048xbf16>, vector<16x2048xf32> -> vector<16x2048xf32>
    %3 = vector.extract_strided_slice %2 {offsets = [0, 0], sizes = [16, 512], strides = [1, 1]} : vector<16x2048xf32> to vector<16x512xf32>
    %4 = vector.extract_strided_slice %2 {offsets = [0, 512], sizes = [16, 512], strides = [1, 1]} : vector<16x2048xf32> to vector<16x512xf32>
    %5 = arith.maximumf %3, %4 : vector<16x512xf32>
    %6 = vector.extract_strided_slice %2 {offsets = [0, 1024], sizes = [16, 512], strides = [1, 1]} : vector<16x2048xf32> to vector<16x512xf32>
    %7 = arith.maximumf %5, %6 : vector<16x512xf32>
    %8 = vector.extract_strided_slice %2 {offsets = [0, 1536], sizes = [16, 512], strides = [1, 1]} : vector<16x2048xf32> to vector<16x512xf32>
    %9 = arith.maximumf %7, %8 : vector<16x512xf32>
    %c0_3 = arith.constant 0 : index
    %c0_4 = arith.constant 0 : index
    %10 = vector.load %arg3[%c0_3, %c0_4] : memref<16x1xf32, #tpu.memory_space<vmem>>, vector<16x1xf32>
    %11 = vector.broadcast %10 : vector<16x1xf32> to vector<16x512xf32>
    %12 = arith.addf %9, %11 : vector<16x512xf32>
    %cst_5 = arith.constant 0.000000e+00 : f32
    %13 = vector.broadcast %cst_5 : f32 to vector<16x512xf32>
    %14 = arith.maximumf %12, %13 : vector<16x512xf32>
    %c0_6 = arith.constant 0 : index
    %c0_7 = arith.constant 0 : index
    %15 = vector.load %arg4[%c0_6, %c0_7] : memref<16x512xf32, #tpu.memory_space<vmem>>, vector<16x512xf32>
    tpu.vector_store %arg4[%c0_6, %c0_7], %14 {strides = array<i32>} : memref<16x512xf32, #tpu.memory_space<vmem>>, vector<16x512xf32>,
    return
  }
  func.func @transform_0(%arg0: i32) -> (i32, i32) {
    %c0_i32 = arith.constant 0 : i32
    %c0_i32_0 = arith.constant 0 : i32
    %c0_i32_1 = arith.constant 0 : i32
    return %c0_i32, %c0_i32_0 : i32, i32
  }
  func.func @transform_1(%arg0: i32) -> (i32, i32) {
    %c0_i32 = arith.constant 0 : i32
    %c0_i32_0 = arith.constant 0 : i32
    %c0_i32_1 = arith.constant 0 : i32
    return %c0_i32, %c0_i32_0 : i32, i32
  }
  func.func @transform_2(%arg0: i32) -> (i32, i32) {
    %c0_i32 = arith.constant 0 : i32
    %c0_i32_0 = arith.constant 0 : i32
    %c0_i32_1 = arith.constant 0 : i32
    return %c0_i32, %c0_i32_0 : i32, i32
  }
  func.func @transform_3(%arg0: i32) -> (i32, i32) {
    %c0_i32 = arith.constant 0 : i32
    %c0_i32_0 = arith.constant 0 : i32
    %c0_i32_1 = arith.constant 0 : i32
    return %c0_i32, %c0_i32_0 : i32, i32
  }
}

module attributes {stable_mosaic.version = 11 : i64} {
  func.func @_head_kernel(%arg0: i32, %arg1: memref<128x144xbf16, #tpu.memory_space<vmem>>, %arg2: memref<144x32xbf16, #tpu.memory_space<vmem>>, %arg3: memref<1x32xf32, #tpu.memory_space<vmem>>, %arg4: memref<72x32xbf16, #tpu.memory_space<vmem>>, %arg5: memref<288x64xbf16, #tpu.memory_space<vmem>>, %arg6: memref<1x64xf32, #tpu.memory_space<vmem>>, %arg7: memref<2x8xf32, #tpu.memory_space<vmem>>, %arg8: memref<2x80xbf16, #tpu.memory_space<vmem>>, %arg9: memref<80x128xbf16, #tpu.memory_space<vmem>>, %arg10: memref<1x128xf32, #tpu.memory_space<vmem>>, %arg11: memref<352x32xbf16, #tpu.memory_space<vmem>>, %arg12: memref<6x32xf32, #tpu.memory_space<vmem>>, %arg13: memref<2x1xf32, #tpu.memory_space<vmem>>) attributes {dimension_semantics = [#tpu.dimension_semantics<arbitrary>], iteration_bounds = array<i64: 1>, scalar_prefetch = 0 : i64, scratch_operands = 0 : i64, tpu.core_type = #tpu.core_type<tc>, window_params = [{pipeline_mode = #tpu.pipeline_mode<synchronous>, transform_indices = @transform_0, window_bounds = array<i64: 128, 144>}, {pipeline_mode = #tpu.pipeline_mode<synchronous>, transform_indices = @transform_1, window_bounds = array<i64: 144, 32>}, {pipeline_mode = #tpu.pipeline_mode<synchronous>, transform_indices = @transform_2, window_bounds = array<i64: 1, 32>}, {pipeline_mode = #tpu.pipeline_mode<synchronous>, transform_indices = @transform_3, window_bounds = array<i64: 72, 32>}, {pipeline_mode = #tpu.pipeline_mode<synchronous>, transform_indices = @transform_4, window_bounds = array<i64: 288, 64>}, {pipeline_mode = #tpu.pipeline_mode<synchronous>, transform_indices = @transform_5, window_bounds = array<i64: 1, 64>}, {pipeline_mode = #tpu.pipeline_mode<synchronous>, transform_indices = @transform_6, window_bounds = array<i64: 2, 8>}, {pipeline_mode = #tpu.pipeline_mode<synchronous>, transform_indices = @transform_7, window_bounds = array<i64: 2, 80>}, {pipeline_mode = #tpu.pipeline_mode<synchronous>, transform_indices = @transform_8, window_bounds = array<i64: 80, 128>}, {pipeline_mode = #tpu.pipeline_mode<synchronous>, transform_indices = @transform_9, window_bounds = array<i64: 1, 128>}, {pipeline_mode = #tpu.pipeline_mode<synchronous>, transform_indices = @transform_10, window_bounds = array<i64: 352, 32>}, {pipeline_mode = #tpu.pipeline_mode<synchronous>, transform_indices = @transform_11, window_bounds = array<i64: 6, 32>}, {pipeline_mode = #tpu.pipeline_mode<synchronous>, transform_indices = @transform_12, window_bounds = array<i64: 2, 1>}]} {
    %c0 = arith.constant 0 : index
    %c0_0 = arith.constant 0 : index
    %0 = vector.load %arg1[%c0, %c0_0] : memref<128x144xbf16, #tpu.memory_space<vmem>>, vector<128x144xbf16>
    %c0_1 = arith.constant 0 : index
    %c0_2 = arith.constant 0 : index
    %1 = vector.load %arg2[%c0_1, %c0_2] : memref<144x32xbf16, #tpu.memory_space<vmem>>, vector<144x32xbf16>
    %cst = arith.constant dense<0.000000e+00> : vector<128x32xf32>
    %2 = tpu.matmul %0, %1, %cst {dimension_numbers = #tpu.dot_dimension_numbers<[1], [0], [0], [1], [0, 0, 1, 1], [], []>} : vector<128x144xbf16>, vector<144x32xbf16>, vector<128x32xf32> -> vector<128x32xf32>
    %3 = vector.extract_strided_slice %2 {offsets = [0, 0], sizes = [32, 32], strides = [1, 1]} : vector<128x32xf32> to vector<32x32xf32>
    %4 = vector.extract_strided_slice %2 {offsets = [32, 0], sizes = [32, 32], strides = [1, 1]} : vector<128x32xf32> to vector<32x32xf32>
    %5 = arith.maximumf %3, %4 : vector<32x32xf32>
    %6 = vector.extract_strided_slice %2 {offsets = [64, 0], sizes = [32, 32], strides = [1, 1]} : vector<128x32xf32> to vector<32x32xf32>
    %7 = arith.maximumf %5, %6 : vector<32x32xf32>
    %8 = vector.extract_strided_slice %2 {offsets = [96, 0], sizes = [32, 32], strides = [1, 1]} : vector<128x32xf32> to vector<32x32xf32>
    %9 = arith.maximumf %7, %8 : vector<32x32xf32>
    %c0_3 = arith.constant 0 : index
    %c0_4 = arith.constant 0 : index
    %10 = vector.load %arg3[%c0_3, %c0_4] : memref<1x32xf32, #tpu.memory_space<vmem>>, vector<1x32xf32>
    %11 = vector.broadcast %10 : vector<1x32xf32> to vector<32x32xf32>
    %12 = arith.addf %9, %11 : vector<32x32xf32>
    %cst_5 = arith.constant 0.000000e+00 : f32
    %13 = vector.broadcast %cst_5 : f32 to vector<32x32xf32>
    %14 = arith.maximumf %12, %13 : vector<32x32xf32>
    %15 = arith.truncf %14 : vector<32x32xf32> to vector<32x32xbf16>
    %c0_6 = arith.constant 0 : index
    %c0_7 = arith.constant 0 : index
    %16 = vector.load %arg4[%c0_6, %c0_7] : memref<72x32xbf16, #tpu.memory_space<vmem>>, vector<72x32xbf16>
    %cst_8 = arith.constant dense<0.000000e+00> : vector<72x32xf32>
    %17 = tpu.matmul %16, %15, %cst_8 {dimension_numbers = #tpu.dot_dimension_numbers<[1], [0], [0], [1], [0, 0, 1, 1], [], []>} : vector<72x32xbf16>, vector<32x32xbf16>, vector<72x32xf32> -> vector<72x32xf32>
    %18 = arith.truncf %17 : vector<72x32xf32> to vector<72x32xbf16>
    %19 = vector.extract_strided_slice %18 {offsets = [0, 0], sizes = [8, 32], strides = [1, 1]} : vector<72x32xbf16> to vector<8x32xbf16>
    %c0_9 = arith.constant 0 : index
    %c0_10 = arith.constant 0 : index
    %20 = vector.load %arg5[%c0_9, %c0_10] : memref<288x64xbf16, #tpu.memory_space<vmem>>, vector<32x64xbf16>
    %cst_11 = arith.constant dense<0.000000e+00> : vector<8x64xf32>
    %21 = tpu.matmul %19, %20, %cst_11 {dimension_numbers = #tpu.dot_dimension_numbers<[1], [0], [0], [1], [0, 0, 1, 1], [], []>} : vector<8x32xbf16>, vector<32x64xbf16>, vector<8x64xf32> -> vector<8x64xf32>
    %22 = vector.extract_strided_slice %18 {offsets = [8, 0], sizes = [8, 32], strides = [1, 1]} : vector<72x32xbf16> to vector<8x32xbf16>
    %c32 = arith.constant 32 : index
    %c0_12 = arith.constant 0 : index
    %23 = vector.load %arg5[%c32, %c0_12] : memref<288x64xbf16, #tpu.memory_space<vmem>>, vector<32x64xbf16>
    %cst_13 = arith.constant dense<0.000000e+00> : vector<8x64xf32>
    %24 = tpu.matmul %22, %23, %cst_13 {dimension_numbers = #tpu.dot_dimension_numbers<[1], [0], [0], [1], [0, 0, 1, 1], [], []>} : vector<8x32xbf16>, vector<32x64xbf16>, vector<8x64xf32> -> vector<8x64xf32>
    %25 = arith.addf %21, %24 : vector<8x64xf32>
    %26 = vector.extract_strided_slice %18 {offsets = [16, 0], sizes = [8, 32], strides = [1, 1]} : vector<72x32xbf16> to vector<8x32xbf16>
    %c64 = arith.constant 64 : index
    %c0_14 = arith.constant 0 : index
    %27 = vector.load %arg5[%c64, %c0_14] : memref<288x64xbf16, #tpu.memory_space<vmem>>, vector<32x64xbf16>
    %cst_15 = arith.constant dense<0.000000e+00> : vector<8x64xf32>
    %28 = tpu.matmul %26, %27, %cst_15 {dimension_numbers = #tpu.dot_dimension_numbers<[1], [0], [0], [1], [0, 0, 1, 1], [], []>} : vector<8x32xbf16>, vector<32x64xbf16>, vector<8x64xf32> -> vector<8x64xf32>
    %29 = arith.addf %25, %28 : vector<8x64xf32>
    %30 = vector.extract_strided_slice %18 {offsets = [24, 0], sizes = [8, 32], strides = [1, 1]} : vector<72x32xbf16> to vector<8x32xbf16>
    %c96 = arith.constant 96 : index
    %c0_16 = arith.constant 0 : index
    %31 = vector.load %arg5[%c96, %c0_16] : memref<288x64xbf16, #tpu.memory_space<vmem>>, vector<32x64xbf16>
    %cst_17 = arith.constant dense<0.000000e+00> : vector<8x64xf32>
    %32 = tpu.matmul %30, %31, %cst_17 {dimension_numbers = #tpu.dot_dimension_numbers<[1], [0], [0], [1], [0, 0, 1, 1], [], []>} : vector<8x32xbf16>, vector<32x64xbf16>, vector<8x64xf32> -> vector<8x64xf32>
    %33 = arith.addf %29, %32 : vector<8x64xf32>
    %34 = vector.extract_strided_slice %18 {offsets = [32, 0], sizes = [8, 32], strides = [1, 1]} : vector<72x32xbf16> to vector<8x32xbf16>
    %c128 = arith.constant 128 : index
    %c0_18 = arith.constant 0 : index
    %35 = vector.load %arg5[%c128, %c0_18] : memref<288x64xbf16, #tpu.memory_space<vmem>>, vector<32x64xbf16>
    %cst_19 = arith.constant dense<0.000000e+00> : vector<8x64xf32>
    %36 = tpu.matmul %34, %35, %cst_19 {dimension_numbers = #tpu.dot_dimension_numbers<[1], [0], [0], [1], [0, 0, 1, 1], [], []>} : vector<8x32xbf16>, vector<32x64xbf16>, vector<8x64xf32> -> vector<8x64xf32>
    %37 = arith.addf %33, %36 : vector<8x64xf32>
    %38 = vector.extract_strided_slice %18 {offsets = [40, 0], sizes = [8, 32], strides = [1, 1]} : vector<72x32xbf16> to vector<8x32xbf16>
    %c160 = arith.constant 160 : index
    %c0_20 = arith.constant 0 : index
    %39 = vector.load %arg5[%c160, %c0_20] : memref<288x64xbf16, #tpu.memory_space<vmem>>, vector<32x64xbf16>
    %cst_21 = arith.constant dense<0.000000e+00> : vector<8x64xf32>
    %40 = tpu.matmul %38, %39, %cst_21 {dimension_numbers = #tpu.dot_dimension_numbers<[1], [0], [0], [1], [0, 0, 1, 1], [], []>} : vector<8x32xbf16>, vector<32x64xbf16>, vector<8x64xf32> -> vector<8x64xf32>
    %41 = arith.addf %37, %40 : vector<8x64xf32>
    %42 = vector.extract_strided_slice %18 {offsets = [48, 0], sizes = [8, 32], strides = [1, 1]} : vector<72x32xbf16> to vector<8x32xbf16>
    %c192 = arith.constant 192 : index
    %c0_22 = arith.constant 0 : index
    %43 = vector.load %arg5[%c192, %c0_22] : memref<288x64xbf16, #tpu.memory_space<vmem>>, vector<32x64xbf16>
    %cst_23 = arith.constant dense<0.000000e+00> : vector<8x64xf32>
    %44 = tpu.matmul %42, %43, %cst_23 {dimension_numbers = #tpu.dot_dimension_numbers<[1], [0], [0], [1], [0, 0, 1, 1], [], []>} : vector<8x32xbf16>, vector<32x64xbf16>, vector<8x64xf32> -> vector<8x64xf32>
    %45 = arith.addf %41, %44 : vector<8x64xf32>
    %46 = vector.extract_strided_slice %18 {offsets = [56, 0], sizes = [8, 32], strides = [1, 1]} : vector<72x32xbf16> to vector<8x32xbf16>
    %c224 = arith.constant 224 : index
    %c0_24 = arith.constant 0 : index
    %47 = vector.load %arg5[%c224, %c0_24] : memref<288x64xbf16, #tpu.memory_space<vmem>>, vector<32x64xbf16>
    %cst_25 = arith.constant dense<0.000000e+00> : vector<8x64xf32>
    %48 = tpu.matmul %46, %47, %cst_25 {dimension_numbers = #tpu.dot_dimension_numbers<[1], [0], [0], [1], [0, 0, 1, 1], [], []>} : vector<8x32xbf16>, vector<32x64xbf16>, vector<8x64xf32> -> vector<8x64xf32>
    %49 = arith.addf %45, %48 : vector<8x64xf32>
    %50 = vector.extract_strided_slice %18 {offsets = [64, 0], sizes = [8, 32], strides = [1, 1]} : vector<72x32xbf16> to vector<8x32xbf16>
    %c256 = arith.constant 256 : index
    %c0_26 = arith.constant 0 : index
    %51 = vector.load %arg5[%c256, %c0_26] : memref<288x64xbf16, #tpu.memory_space<vmem>>, vector<32x64xbf16>
    %cst_27 = arith.constant dense<0.000000e+00> : vector<8x64xf32>
    %52 = tpu.matmul %50, %51, %cst_27 {dimension_numbers = #tpu.dot_dimension_numbers<[1], [0], [0], [1], [0, 0, 1, 1], [], []>} : vector<8x32xbf16>, vector<32x64xbf16>, vector<8x64xf32> -> vector<8x64xf32>
    %53 = arith.addf %49, %52 : vector<8x64xf32>
    %c0_28 = arith.constant 0 : index
    %c0_29 = arith.constant 0 : index
    %54 = vector.load %arg6[%c0_28, %c0_29] : memref<1x64xf32, #tpu.memory_space<vmem>>, vector<1x64xf32>
    %55 = vector.broadcast %54 : vector<1x64xf32> to vector<8x64xf32>
    %56 = arith.addf %53, %55 : vector<8x64xf32>
    %cst_30 = arith.constant 0.000000e+00 : f32
    %57 = vector.broadcast %cst_30 : f32 to vector<8x64xf32>
    %58 = arith.maximumf %56, %57 : vector<8x64xf32>
    %c0_31 = arith.constant 0 : index
    %c0_32 = arith.constant 0 : index
    %59 = vector.load %arg7[%c0_31, %c0_32] : memref<2x8xf32, #tpu.memory_space<vmem>>, vector<2x8xf32>
    %cst_33 = arith.constant dense<0.000000e+00> : vector<2x64xf32>
    %60 = tpu.matmul %59, %58, %cst_33 {dimension_numbers = #tpu.dot_dimension_numbers<[1], [0], [0], [1], [0, 0, 1, 1], [], []>} : vector<2x8xf32>, vector<8x64xf32>, vector<2x64xf32> -> vector<2x64xf32>
    %61 = arith.truncf %60 : vector<2x64xf32> to vector<2x64xbf16>
    %c0_34 = arith.constant 0 : index
    %c0_35 = arith.constant 0 : index
    %62 = vector.load %arg11[%c0_34, %c0_35] : memref<352x32xbf16, #tpu.memory_space<vmem>>, vector<64x32xbf16>
    %cst_36 = arith.constant dense<0.000000e+00> : vector<2x32xf32>
    %63 = tpu.matmul %61, %62, %cst_36 {dimension_numbers = #tpu.dot_dimension_numbers<[1], [0], [0], [1], [0, 0, 1, 1], [], []>} : vector<2x64xbf16>, vector<64x32xbf16>, vector<2x32xf32> -> vector<2x32xf32>
    %c0_37 = arith.constant 0 : index
    %c0_38 = arith.constant 0 : index
    %64 = vector.load %arg12[%c0_37, %c0_38] : memref<6x32xf32, #tpu.memory_space<vmem>>, vector<1x32xf32>
    %65 = vector.broadcast %64 : vector<1x32xf32> to vector<2x32xf32>
    %66 = arith.addf %63, %65 : vector<2x32xf32>
    %67 = arith.truncf %66 : vector<2x32xf32> to vector<2x32xbf16>
    %c64_39 = arith.constant 64 : index
    %c0_40 = arith.constant 0 : index
    %68 = vector.load %arg11[%c64_39, %c0_40] : memref<352x32xbf16, #tpu.memory_space<vmem>>, vector<32x32xbf16>
    %cst_41 = arith.constant dense<0.000000e+00> : vector<2x32xf32>
    %69 = tpu.matmul %67, %68, %cst_41 {dimension_numbers = #tpu.dot_dimension_numbers<[1], [0], [0], [1], [0, 0, 1, 1], [], []>} : vector<2x32xbf16>, vector<32x32xbf16>, vector<2x32xf32> -> vector<2x32xf32>
    %c1 = arith.constant 1 : index
    %c0_42 = arith.constant 0 : index
    %70 = vector.load %arg12[%c1, %c0_42] : memref<6x32xf32, #tpu.memory_space<vmem>>, vector<1x32xf32>
    %71 = vector.broadcast %70 : vector<1x32xf32> to vector<2x32xf32>
    %72 = arith.addf %69, %71 : vector<2x32xf32>
    %73 = arith.truncf %72 : vector<2x32xf32> to vector<2x32xbf16>
    %c96_43 = arith.constant 96 : index
    %c0_44 = arith.constant 0 : index
    %74 = vector.load %arg11[%c96_43, %c0_44] : memref<352x32xbf16, #tpu.memory_space<vmem>>, vector<32x32xbf16>
    %cst_45 = arith.constant dense<0.000000e+00> : vector<2x32xf32>
    %75 = tpu.matmul %73, %74, %cst_45 {dimension_numbers = #tpu.dot_dimension_numbers<[1], [0], [0], [1], [0, 0, 1, 1], [], []>} : vector<2x32xbf16>, vector<32x32xbf16>, vector<2x32xf32> -> vector<2x32xf32>
    %76 = arith.truncf %66 : vector<2x32xf32> to vector<2x32xbf16>
    %c128_46 = arith.constant 128 : index
    %c0_47 = arith.constant 0 : index
    %77 = vector.load %arg11[%c128_46, %c0_47] : memref<352x32xbf16, #tpu.memory_space<vmem>>, vector<32x32xbf16>
    %cst_48 = arith.constant dense<0.000000e+00> : vector<2x32xf32>
    %78 = tpu.matmul %76, %77, %cst_48 {dimension_numbers = #tpu.dot_dimension_numbers<[1], [0], [0], [1], [0, 0, 1, 1], [], []>} : vector<2x32xbf16>, vector<32x32xbf16>, vector<2x32xf32> -> vector<2x32xf32>
    %79 = arith.addf %75, %78 : vector<2x32xf32>
    %c2 = arith.constant 2 : index
    %c0_49 = arith.constant 0 : index
    %80 = vector.load %arg12[%c2, %c0_49] : memref<6x32xf32, #tpu.memory_space<vmem>>, vector<1x32xf32>
    %81 = vector.broadcast %80 : vector<1x32xf32> to vector<2x32xf32>
    %82 = arith.addf %79, %81 : vector<2x32xf32>
    %cst_50 = arith.constant 0.000000e+00 : f32
    %83 = vector.broadcast %cst_50 : f32 to vector<2x32xf32>
    %84 = arith.maximumf %82, %83 : vector<2x32xf32>
    %85 = arith.truncf %84 : vector<2x32xf32> to vector<2x32xbf16>
    %c160_51 = arith.constant 160 : index
    %c0_52 = arith.constant 0 : index
    %86 = vector.load %arg11[%c160_51, %c0_52] : memref<352x32xbf16, #tpu.memory_space<vmem>>, vector<32x32xbf16>
    %cst_53 = arith.constant dense<0.000000e+00> : vector<2x32xf32>
    %87 = tpu.matmul %85, %86, %cst_53 {dimension_numbers = #tpu.dot_dimension_numbers<[1], [0], [0], [1], [0, 0, 1, 1], [], []>} : vector<2x32xbf16>, vector<32x32xbf16>, vector<2x32xf32> -> vector<2x32xf32>
    %c3 = arith.constant 3 : index
    %c0_54 = arith.constant 0 : index
    %88 = vector.load %arg12[%c3, %c0_54] : memref<6x32xf32, #tpu.memory_space<vmem>>, vector<1x32xf32>
    %89 = vector.broadcast %88 : vector<1x32xf32> to vector<2x32xf32>
    %90 = arith.addf %87, %89 : vector<2x32xf32>
    %cst_55 = arith.constant 0.000000e+00 : f32
    %91 = vector.broadcast %cst_55 : f32 to vector<2x32xf32>
    %92 = arith.maximumf %90, %91 : vector<2x32xf32>
    %c0_56 = arith.constant 0 : index
    %c0_57 = arith.constant 0 : index
    %93 = vector.load %arg8[%c0_56, %c0_57] : memref<2x80xbf16, #tpu.memory_space<vmem>>, vector<2x80xbf16>
    %c0_58 = arith.constant 0 : index
    %c0_59 = arith.constant 0 : index
    %94 = vector.load %arg9[%c0_58, %c0_59] : memref<80x128xbf16, #tpu.memory_space<vmem>>, vector<80x128xbf16>
    %cst_60 = arith.constant dense<0.000000e+00> : vector<2x128xf32>
    %95 = tpu.matmul %93, %94, %cst_60 {dimension_numbers = #tpu.dot_dimension_numbers<[1], [0], [0], [1], [0, 0, 1, 1], [], []>} : vector<2x80xbf16>, vector<80x128xbf16>, vector<2x128xf32> -> vector<2x128xf32>
    %c0_61 = arith.constant 0 : index
    %c0_62 = arith.constant 0 : index
    %96 = vector.load %arg10[%c0_61, %c0_62] : memref<1x128xf32, #tpu.memory_space<vmem>>, vector<1x128xf32>
    %97 = vector.broadcast %96 : vector<1x128xf32> to vector<2x128xf32>
    %98 = arith.addf %95, %97 : vector<2x128xf32>
    %cst_63 = arith.constant 0.000000e+00 : f32
    %99 = vector.broadcast %cst_63 : f32 to vector<2x128xf32>
    %100 = arith.maximumf %98, %99 : vector<2x128xf32>
    %101 = arith.truncf %92 : vector<2x32xf32> to vector<2x32xbf16>
    %c192_64 = arith.constant 192 : index
    %c0_65 = arith.constant 0 : index
    %102 = vector.load %arg11[%c192_64, %c0_65] : memref<352x32xbf16, #tpu.memory_space<vmem>>, vector<32x32xbf16>
    %cst_66 = arith.constant dense<0.000000e+00> : vector<2x32xf32>
    %103 = tpu.matmul %101, %102, %cst_66 {dimension_numbers = #tpu.dot_dimension_numbers<[1], [0], [0], [1], [0, 0, 1, 1], [], []>} : vector<2x32xbf16>, vector<32x32xbf16>, vector<2x32xf32> -> vector<2x32xf32>
    %c4 = arith.constant 4 : index
    %c0_67 = arith.constant 0 : index
    %104 = vector.load %arg12[%c4, %c0_67] : memref<6x32xf32, #tpu.memory_space<vmem>>, vector<1x32xf32>
    %105 = vector.broadcast %104 : vector<1x32xf32> to vector<2x32xf32>
    %106 = arith.addf %103, %105 : vector<2x32xf32>
    %107 = math.tanh %106 : vector<2x32xf32>
    %108 = arith.truncf %100 : vector<2x128xf32> to vector<2x128xbf16>
    %c224_68 = arith.constant 224 : index
    %c0_69 = arith.constant 0 : index
    %109 = vector.load %arg11[%c224_68, %c0_69] : memref<352x32xbf16, #tpu.memory_space<vmem>>, vector<128x32xbf16>
    %cst_70 = arith.constant dense<0.000000e+00> : vector<2x32xf32>
    %110 = tpu.matmul %108, %109, %cst_70 {dimension_numbers = #tpu.dot_dimension_numbers<[1], [0], [0], [1], [0, 0, 1, 1], [], []>} : vector<2x128xbf16>, vector<128x32xbf16>, vector<2x32xf32> -> vector<2x32xf32>
    %c5 = arith.constant 5 : index
    %c0_71 = arith.constant 0 : index
    %111 = vector.load %arg12[%c5, %c0_71] : memref<6x32xf32, #tpu.memory_space<vmem>>, vector<1x32xf32>
    %112 = vector.broadcast %111 : vector<1x32xf32> to vector<2x32xf32>
    %113 = arith.addf %110, %112 : vector<2x32xf32>
    %114 = math.tanh %113 : vector<2x32xf32>
    %115 = arith.mulf %114, %107 : vector<2x32xf32>
    %cst_72 = arith.constant dense<0.000000e+00> : vector<2xf32>
    %116 = vector.multi_reduction <add>, %115, %cst_72 [1] : vector<2x32xf32> to vector<2xf32>
    %117 = vector.shape_cast %116 : vector<2xf32> to vector<2x1xf32>
    %c0_73 = arith.constant 0 : index
    %c0_74 = arith.constant 0 : index
    %118 = vector.load %arg13[%c0_73, %c0_74] : memref<2x1xf32, #tpu.memory_space<vmem>>, vector<2x1xf32>
    tpu.vector_store %arg13[%c0_73, %c0_74], %117 {strides = array<i32>} : memref<2x1xf32, #tpu.memory_space<vmem>>, vector<2x1xf32>,
    return
  }
  func.func @transform_0(%arg0: i32) -> (i32, i32) {
    %c0_i32 = arith.constant 0 : i32
    %c0_i32_0 = arith.constant 0 : i32
    %c0_i32_1 = arith.constant 0 : i32
    return %c0_i32, %c0_i32_0 : i32, i32
  }
  func.func @transform_1(%arg0: i32) -> (i32, i32) {
    %c0_i32 = arith.constant 0 : i32
    %c0_i32_0 = arith.constant 0 : i32
    %c0_i32_1 = arith.constant 0 : i32
    return %c0_i32, %c0_i32_0 : i32, i32
  }
  func.func @transform_2(%arg0: i32) -> (i32, i32) {
    %c0_i32 = arith.constant 0 : i32
    %c0_i32_0 = arith.constant 0 : i32
    %c0_i32_1 = arith.constant 0 : i32
    return %c0_i32, %c0_i32_0 : i32, i32
  }
  func.func @transform_3(%arg0: i32) -> (i32, i32) {
    %c0_i32 = arith.constant 0 : i32
    %c0_i32_0 = arith.constant 0 : i32
    %c0_i32_1 = arith.constant 0 : i32
    return %c0_i32, %c0_i32_0 : i32, i32
  }
  func.func @transform_4(%arg0: i32) -> (i32, i32) {
    %c0_i32 = arith.constant 0 : i32
    %c0_i32_0 = arith.constant 0 : i32
    %c0_i32_1 = arith.constant 0 : i32
    return %c0_i32, %c0_i32_0 : i32, i32
  }
  func.func @transform_5(%arg0: i32) -> (i32, i32) {
    %c0_i32 = arith.constant 0 : i32
    %c0_i32_0 = arith.constant 0 : i32
    %c0_i32_1 = arith.constant 0 : i32
    return %c0_i32, %c0_i32_0 : i32, i32
  }
  func.func @transform_6(%arg0: i32) -> (i32, i32) {
    %c0_i32 = arith.constant 0 : i32
    %c0_i32_0 = arith.constant 0 : i32
    %c0_i32_1 = arith.constant 0 : i32
    return %c0_i32, %c0_i32_0 : i32, i32
  }
  func.func @transform_7(%arg0: i32) -> (i32, i32) {
    %c0_i32 = arith.constant 0 : i32
    %c0_i32_0 = arith.constant 0 : i32
    %c0_i32_1 = arith.constant 0 : i32
    return %c0_i32, %c0_i32_0 : i32, i32
  }
  func.func @transform_8(%arg0: i32) -> (i32, i32) {
    %c0_i32 = arith.constant 0 : i32
    %c0_i32_0 = arith.constant 0 : i32
    %c0_i32_1 = arith.constant 0 : i32
    return %c0_i32, %c0_i32_0 : i32, i32
  }
  func.func @transform_9(%arg0: i32) -> (i32, i32) {
    %c0_i32 = arith.constant 0 : i32
    %c0_i32_0 = arith.constant 0 : i32
    %c0_i32_1 = arith.constant 0 : i32
    return %c0_i32, %c0_i32_0 : i32, i32
  }
  func.func @transform_10(%arg0: i32) -> (i32, i32) {
    %c0_i32 = arith.constant 0 : i32
    %c0_i32_0 = arith.constant 0 : i32
    %c0_i32_1 = arith.constant 0 : i32
    return %c0_i32, %c0_i32_0 : i32, i32
  }
  func.func @transform_11(%arg0: i32) -> (i32, i32) {
    %c0_i32 = arith.constant 0 : i32
    %c0_i32_0 = arith.constant 0 : i32
    %c0_i32_1 = arith.constant 0 : i32
    return %c0_i32, %c0_i32_0 : i32, i32
  }
  func.func @transform_12(%arg0: i32) -> (i32, i32) {
    %c0_i32 = arith.constant 0 : i32
    %c0_i32_0 = arith.constant 0 : i32
    %c0_i32_1 = arith.constant 0 : i32
    return %c0_i32, %c0_i32_0 : i32, i32
  }
}

</mosaic_0001>

<llo_original>
// kernel: forward.2
$region0: #{forward.2}
  #allocation0 [shape = 'u32[]', space=smem, size = 0x4, offset = 0x4, fixed_abs, tag = 'smem constant byte address 0x4 - core index']
  #allocation1 [shape = 'u32[72,128]{1,0:T(1,128)}', space=vmem, size = 0x9000, scoped, tag = 'internal scratch']
  %s0 = inlined_call_operand.vmem [shape: bf16[27,2048], index: 0, kind: input, shape index: {}]
  %s1 = inlined_call_operand.vmem [shape: bf16[16,27], index: 1, kind: input, shape index: {}]
  %s2 = inlined_call_operand.vmem [shape: f32[16,1], index: 2, kind: input, shape index: {}]
  %s3 = inlined_call_operand.vmem [shape: f32[16,512], index: 3, kind: output, shape index: {}]
  %s4 = sld [smem:[#allocation0]]
  $region22: #{forward.2} parent=0
    _
  %s6 = ssub.s32 1, %s4
  %s7 = scalar_select 0, %s6, %s4
  // Predicated region
  $region2: #{forward.2} parent=0 // pred_check
    _
  $region3: #{forward.2} parent=0 // pred_check_branch
    %9 = sbr.rel (0) target = $region5
  $region4: #{forward.2} parent=0 // pred_region
    _
  $region5: #{forward.2} parent=0 // pred_fallthru
    _
  // Predicated region
  $region6: #{forward.2} parent=0 // pred_check
    _
  $region7: #{forward.2} parent=0 // pred_check_branch
    %11 = sbr.rel (0) target = $region9
  $region8: #{forward.2} parent=0 // pred_region
    _
  $region9: #{forward.2} parent=0 // pred_fallthru
    _
  // Predicated region
  $region10: #{forward.2} parent=0 // pred_check
    _
  $region11: #{forward.2} parent=0 // pred_check_branch
    %13 = sbr.rel (0) target = $region13
  $region12: #{forward.2} parent=0 // pred_region
    _
  $region13: #{forward.2} parent=0 // pred_fallthru
    _
  %v15 = vld [vmem:[%s1] sm:$0xf]
  %v16 = vld [vmem:[%s1 + $0x4] sm:$0xf]
  %v17 = vld [vmem:[%s0] sm:$0xff]
  %v18 = vld [vmem:[%s0 + $0x8] sm:$0xff]
  %v19 = vld [vmem:[%s0 + $0x10] sm:$0xff]
  %v20 = vld [vmem:[%s0 + $0x18] sm:$0xff]
  %v21 = vld [vmem:[%s0 + $0x20] sm:$0xff]
  %v22 = vld [vmem:[%s0 + $0x28] sm:$0xff]
  %v23 = vld [vmem:[%s0 + $0x30] sm:$0xff]
  %v24 = vld [vmem:[%s0 + $0x38] sm:$0xff]
  %v25 = vld [vmem:[%s0 + $0x40] sm:$0xff]
  %v26 = vld [vmem:[%s0 + $0x48] sm:$0xff]
  %v27 = vld [vmem:[%s0 + $0x50] sm:$0xff]
  %v28 = vld [vmem:[%s0 + $0x58] sm:$0xff]
  %v29 = vld [vmem:[%s0 + $0x60] sm:$0xff]
  %v30 = vld [vmem:[%s0 + $0x68] sm:$0xff]
  %v31 = vld [vmem:[%s0 + $0x70] sm:$0xff]
  %v32 = vld [vmem:[%s0 + $0x78] sm:$0xff]
  %v33 = vld [vmem:[%s0 + $0x80] sm:$0xff]
  %v34 = vld [vmem:[%s0 + $0x88] sm:$0xff]
  %v35 = vld [vmem:[%s0 + $0x90] sm:$0xff]
  %v36 = vld [vmem:[%s0 + $0x98] sm:$0xff]
  %v37 = vld [vmem:[%s0 + $0xa0] sm:$0xff]
  %v38 = vld [vmem:[%s0 + $0xa8] sm:$0xff]
  %v39 = vld [vmem:[%s0 + $0xb0] sm:$0xff]
  %v40 = vld [vmem:[%s0 + $0xb8] sm:$0xff]
  %v41 = vld [vmem:[%s0 + $0xc0] sm:$0x33]
  %v42 = vld [vmem:[%s0 + $0xc8] sm:$0x33]
  %v43 = vld [vmem:[%s0 + $0xd0] sm:$0x33]
  %v44 = vld [vmem:[%s0 + $0xd8] sm:$0x33]
  %v45 = vld [vmem:[%s0 + $0xe0] sm:$0x33]
  %v46 = vld [vmem:[%s0 + $0xe8] sm:$0x33]
  %v47 = vld [vmem:[%s0 + $0xf0] sm:$0x33]
  %v48 = vld [vmem:[%s0 + $0xf8] sm:$0x33]
  %v51 = vunpack.c.l.b16 %v15
  %v52 = vunpack.c.l.b16 %v16
  %v53 = vpack.c.b16 %v52, %v51
  %v86 = vunpack.c.l.b16 %v17
  %v87 = vunpack.c.h.b16 %v17
  %v88 = vunpack.c.l.b16 %v18
  %v89 = vunpack.c.h.b16 %v18
  %v90 = vunpack.c.l.b16 %v19
  %v91 = vunpack.c.h.b16 %v19
  %v92 = vunpack.c.l.b16 %v20
  %v93 = vunpack.c.h.b16 %v20
  %v94 = vunpack.c.l.b16 %v21
  %v95 = vunpack.c.h.b16 %v21
  %v96 = vunpack.c.l.b16 %v22
  %v97 = vunpack.c.h.b16 %v22
  %v98 = vunpack.c.l.b16 %v23
  %v99 = vunpack.c.h.b16 %v23
  %v100 = vunpack.c.l.b16 %v24
  %v101 = vunpack.c.h.b16 %v24
  %v102 = vunpack.c.l.b16 %v25
  %v103 = vunpack.c.h.b16 %v25
  %v104 = vunpack.c.l.b16 %v26
  %v105 = vunpack.c.h.b16 %v26
  %v106 = vunpack.c.l.b16 %v27
  %v107 = vunpack.c.h.b16 %v27
  %v108 = vunpack.c.l.b16 %v28
  %v109 = vunpack.c.h.b16 %v28
  %v110 = vunpack.c.l.b16 %v29
  %v111 = vunpack.c.h.b16 %v29
  %v112 = vunpack.c.l.b16 %v30
  %v113 = vunpack.c.h.b16 %v30
  %v114 = vunpack.c.l.b16 %v31
  %v115 = vunpack.c.h.b16 %v31
  %v116 = vunpack.c.l.b16 %v32
  %v117 = vunpack.c.h.b16 %v32
  %v118 = vunpack.c.l.b16 %v33
  %v119 = vunpack.c.h.b16 %v33
  %v120 = vunpack.c.l.b16 %v34
  %v121 = vunpack.c.h.b16 %v34
  %v122 = vunpack.c.l.b16 %v35
  %v123 = vunpack.c.h.b16 %v35
  %v124 = vunpack.c.l.b16 %v36
  %v125 = vunpack.c.h.b16 %v36
  %v126 = vunpack.c.l.b16 %v37
  %v127 = vunpack.c.h.b16 %v37
  %v128 = vunpack.c.l.b16 %v38
  %v129 = vunpack.c.h.b16 %v38
  %v130 = vunpack.c.l.b16 %v39
  %v131 = vunpack.c.h.b16 %v39
  %v132 = vunpack.c.l.b16 %v40
  %v133 = vunpack.c.h.b16 %v40
  %v134 = vunpack.c.l.b16 %v41
  %v135 = vunpack.c.h.b16 %v41
  %v136 = vunpack.c.l.b16 %v42
  %v137 = vunpack.c.h.b16 %v42
  %v138 = vunpack.c.l.b16 %v43
  %v139 = vunpack.c.h.b16 %v43
  %v140 = vunpack.c.l.b16 %v44
  %v141 = vunpack.c.h.b16 %v44
  %v142 = vunpack.c.l.b16 %v45
  %v143 = vunpack.c.h.b16 %v45
  %v144 = vunpack.c.l.b16 %v46
  %v145 = vunpack.c.h.b16 %v46
  %v146 = vunpack.c.l.b16 %v47
  %v147 = vunpack.c.h.b16 %v47
  %v148 = vunpack.c.l.b16 %v48
  %v149 = vunpack.c.h.b16 %v48
  %v150 = vpack.c.b16 %v102, %v86
  %v151 = vpack.c.b16 %v103, %v87
  %v152 = vpack.c.b16 %v104, %v88
  %v153 = vpack.c.b16 %v105, %v89
  %v154 = vpack.c.b16 %v106, %v90
  %v155 = vpack.c.b16 %v107, %v91
  %v156 = vpack.c.b16 %v108, %v92
  %v157 = vpack.c.b16 %v109, %v93
  %v158 = vpack.c.b16 %v110, %v94
  %v159 = vpack.c.b16 %v111, %v95
  %v160 = vpack.c.b16 %v112, %v96
  %v161 = vpack.c.b16 %v113, %v97
  %v162 = vpack.c.b16 %v114, %v98
  %v163 = vpack.c.b16 %v115, %v99
  %v164 = vpack.c.b16 %v116, %v100
  %v165 = vpack.c.b16 %v117, %v101
  %v166 = vpack.c.b16 %v134, %v118
  %v167 = vpack.c.b16 %v135, %v119
  %v168 = vpack.c.b16 %v136, %v120
  %v169 = vpack.c.b16 %v137, %v121
  %v170 = vpack.c.b16 %v138, %v122
  %v171 = vpack.c.b16 %v139, %v123
  %v172 = vpack.c.b16 %v140, %v124
  %v173 = vpack.c.b16 %v141, %v125
  %v174 = vpack.c.b16 %v142, %v126
  %v175 = vpack.c.b16 %v143, %v127
  %v176 = vpack.c.b16 %v144, %v128
  %v177 = vpack.c.b16 %v145, %v129
  %v178 = vpack.c.b16 %v146, %v130
  %v179 = vpack.c.b16 %v147, %v131
  %v180 = vpack.c.b16 %v148, %v132
  %v181 = vpack.c.b16 %v149, %v133
  %vm198 = vcmask 220160
  %v200 = vsel %vm198, %v53, 0
  %vm202 = vcmask 1044480
  %vm203 = vcmask 1045504
  %v204 = vsel %vm202, 4294967295, 65535
  %v205 = vsel %vm203, %v204, 0
  %v207 = vand.u32 %v166, %v205
  %v210 = vand.u32 %v167, %v205
  %v213 = vand.u32 %v168, %v205
  %v216 = vand.u32 %v169, %v205
  %v219 = vand.u32 %v170, %v205
  %v222 = vand.u32 %v171, %v205
  %v225 = vand.u32 %v172, %v205
  %v228 = vand.u32 %v173, %v205
  %v231 = vand.u32 %v174, %v205
  %v234 = vand.u32 %v175, %v205
  %v237 = vand.u32 %v176, %v205
  %v240 = vand.u32 %v177, %v205
  %v243 = vand.u32 %v178, %v205
  %v246 = vand.u32 %v179, %v205
  %v249 = vand.u32 %v180, %v205
  %v252 = vand.u32 %v181, %v205
  %254 = vmatpush.bf16.msra.mxu0 0
  %255 = vmatpush.bf16.msra.mxu0 0
  %256 = vmatpush.bf16.msra.mxu0 0
  %257 = vmatpush.bf16.msra.mxu0 0
  %258 = vmatpush.bf16.msra.mxu0 0
  %259 = vmatpush.bf16.msra.mxu0 0
  %260 = vmatpush.bf16.msra.mxu0 %v207
  %261 = vmatpush.bf16.msra.mxu0 %v150
  %262 = vmatmul.bf16.gmra.mxu0 %v200
  %v263 = vpop.f32.mrf.mxu0
  %v264 = vadd.f32 0.0, %v263
  %v265 = vpop.f32.mrf.mxu0
  %v266 = vadd.f32 0.0, %v265
  %267 = vdwg.mxu0
  %268 = vmatpush.bf16.msra.mxu0 0
  %269 = vmatpush.bf16.msra.mxu0 0
  %270 = vmatpush.bf16.msra.mxu0 0
  %271 = vmatpush.bf16.msra.mxu0 0
  %272 = vmatpush.bf16.msra.mxu0 0
  %273 = vmatpush.bf16.msra.mxu0 0
  %274 = vmatpush.bf16.msra.mxu0 %v210
  %275 = vmatpush.bf16.msra.mxu0 %v151
  %276 = vmatmul.bf16.gmra.mxu0 %v200
  %v277 = vpop.f32.mrf.mxu0
  %v278 = vadd.f32 0.0, %v277
  %v279 = vpop.f32.mrf.mxu0
  %v280 = vadd.f32 0.0, %v279
  %281 = vdwg.mxu0
  %282 = vmatpush.bf16.msra.mxu0 0
  %283 = vmatpush.bf16.msra.mxu0 0
  %284 = vmatpush.bf16.msra.mxu0 0
  %285 = vmatpush.bf16.msra.mxu0 0
  %286 = vmatpush.bf16.msra.mxu0 0
  %287 = vmatpush.bf16.msra.mxu0 0
  %288 = vmatpush.bf16.msra.mxu0 %v213
  %289 = vmatpush.bf16.msra.mxu0 %v152
  %290 = vmatmul.bf16.gmra.mxu0 %v200
  %v291 = vpop.f32.mrf.mxu0
  %v292 = vadd.f32 0.0, %v291
  %v293 = vpop.f32.mrf.mxu0
  %v294 = vadd.f32 0.0, %v293
  %295 = vdwg.mxu0
  %296 = vmatpush.bf16.msra.mxu0 0
  %297 = vmatpush.bf16.msra.mxu0 0
  %298 = vmatpush.bf16.msra.mxu0 0
  %299 = vmatpush.bf16.msra.mxu0 0
  %300 = vmatpush.bf16.msra.mxu0 0
  %301 = vmatpush.bf16.msra.mxu0 0
  %302 = vmatpush.bf16.msra.mxu0 %v216
  %303 = vmatpush.bf16.msra.mxu0 %v153
  %304 = vmatmul.bf16.gmra.mxu0 %v200
  %v305 = vpop.f32.mrf.mxu0
  %v306 = vadd.f32 0.0, %v305
  %v307 = vpop.f32.mrf.mxu0
  %v308 = vadd.f32 0.0, %v307
  %309 = vdwg.mxu0
  %310 = vmatpush.bf16.msra.mxu0 0
  %311 = vmatpush.bf16.msra.mxu0 0
  %312 = vmatpush.bf16.msra.mxu0 0
  %313 = vmatpush.bf16.msra.mxu0 0
  %314 = vmatpush.bf16.msra.mxu0 0
  %315 = vmatpush.bf16.msra.mxu0 0
  %316 = vmatpush.bf16.msra.mxu0 %v219
  %317 = vmatpush.bf16.msra.mxu0 %v154
  %318 = vmatmul.bf16.gmra.mxu0 %v200
  %v319 = vpop.f32.mrf.mxu0
  %v320 = vadd.f32 0.0, %v319
  %v321 = vpop.f32.mrf.mxu0
  %v322 = vadd.f32 0.0, %v321
  %323 = vdwg.mxu0
  %324 = vmatpush.bf16.msra.mxu0 0
  %325 = vmatpush.bf16.msra.mxu0 0
  %326 = vmatpush.bf16.msra.mxu0 0
  %327 = vmatpush.bf16.msra.mxu0 0
  %328 = vmatpush.bf16.msra.mxu0 0
  %329 = vmatpush.bf16.msra.mxu0 0
  %330 = vmatpush.bf16.msra.mxu0 %v222
  %331 = vmatpush.bf16.msra.mxu0 %v155
  %332 = vmatmul.bf16.gmra.mxu0 %v200
  %v333 = vpop.f32.mrf.mxu0
  %v334 = vadd.f32 0.0, %v333
  %v335 = vpop.f32.mrf.mxu0
  %v336 = vadd.f32 0.0, %v335
  %337 = vdwg.mxu0
  %338 = vmatpush.bf16.msra.mxu0 0
  %339 = vmatpush.bf16.msra.mxu0 0
  %340 = vmatpush.bf16.msra.mxu0 0
  %341 = vmatpush.bf16.msra.mxu0 0
  %342 = vmatpush.bf16.msra.mxu0 0
  %343 = vmatpush.bf16.msra.mxu0 0
  %344 = vmatpush.bf16.msra.mxu0 %v225
  %345 = vmatpush.bf16.msra.mxu0 %v156
  %346 = vmatmul.bf16.gmra.mxu0 %v200
  %v347 = vpop.f32.mrf.mxu0
  %v348 = vadd.f32 0.0, %v347
  %v349 = vpop.f32.mrf.mxu0
  %v350 = vadd.f32 0.0, %v349
  %351 = vdwg.mxu0
  %352 = vmatpush.bf16.msra.mxu0 0
  %353 = vmatpush.bf16.msra.mxu0 0
  %354 = vmatpush.bf16.msra.mxu0 0
  %355 = vmatpush.bf16.msra.mxu0 0
  %356 = vmatpush.bf16.msra.mxu0 0
  %357 = vmatpush.bf16.msra.mxu0 0
  %358 = vmatpush.bf16.msra.mxu0 %v228
  %359 = vmatpush.bf16.msra.mxu0 %v157
  %360 = vmatmul.bf16.gmra.mxu0 %v200
  %v361 = vpop.f32.mrf.mxu0
  %v362 = vadd.f32 0.0, %v361
  %v363 = vpop.f32.mrf.mxu0
  %v364 = vadd.f32 0.0, %v363
  %365 = vdwg.mxu0
  %366 = vmatpush.bf16.msra.mxu0 0
  %367 = vmatpush.bf16.msra.mxu0 0
  %368 = vmatpush.bf16.msra.mxu0 0
  %369 = vmatpush.bf16.msra.mxu0 0
  %370 = vmatpush.bf16.msra.mxu0 0
  %371 = vmatpush.bf16.msra.mxu0 0
  %372 = vmatpush.bf16.msra.mxu0 %v231
  %373 = vmatpush.bf16.msra.mxu0 %v158
  %374 = vmatmul.bf16.gmra.mxu0 %v200
  %v375 = vpop.f32.mrf.mxu0
  %v376 = vadd.f32 0.0, %v375
  %v377 = vpop.f32.mrf.mxu0
  %v378 = vadd.f32 0.0, %v377
  %379 = vdwg.mxu0
  %380 = vmatpush.bf16.msra.mxu0 0
  %381 = vmatpush.bf16.msra.mxu0 0
  %382 = vmatpush.bf16.msra.mxu0 0
  %383 = vmatpush.bf16.msra.mxu0 0
  %384 = vmatpush.bf16.msra.mxu0 0
  %385 = vmatpush.bf16.msra.mxu0 0
  %386 = vmatpush.bf16.msra.mxu0 %v234
  %387 = vmatpush.bf16.msra.mxu0 %v159
  %388 = vmatmul.bf16.gmra.mxu0 %v200
  %v389 = vpop.f32.mrf.mxu0
  %v390 = vadd.f32 0.0, %v389
  %v391 = vpop.f32.mrf.mxu0
  %v392 = vadd.f32 0.0, %v391
  %393 = vdwg.mxu0
  %394 = vmatpush.bf16.msra.mxu0 0
  %395 = vmatpush.bf16.msra.mxu0 0
  %396 = vmatpush.bf16.msra.mxu0 0
  %397 = vmatpush.bf16.msra.mxu0 0
  %398 = vmatpush.bf16.msra.mxu0 0
  %399 = vmatpush.bf16.msra.mxu0 0
  %400 = vmatpush.bf16.msra.mxu0 %v237
  %401 = vmatpush.bf16.msra.mxu0 %v160
  %402 = vmatmul.bf16.gmra.mxu0 %v200
  %v403 = vpop.f32.mrf.mxu0
  %v404 = vadd.f32 0.0, %v403
  %v405 = vpop.f32.mrf.mxu0
  %v406 = vadd.f32 0.0, %v405
  %407 = vdwg.mxu0
  %408 = vmatpush.bf16.msra.mxu0 0
  %409 = vmatpush.bf16.msra.mxu0 0
  %410 = vmatpush.bf16.msra.mxu0 0
  %411 = vmatpush.bf16.msra.mxu0 0
  %412 = vmatpush.bf16.msra.mxu0 0
  %413 = vmatpush.bf16.msra.mxu0 0
  %414 = vmatpush.bf16.msra.mxu0 %v240
  %415 = vmatpush.bf16.msra.mxu0 %v161
  %416 = vmatmul.bf16.gmra.mxu0 %v200
  %v417 = vpop.f32.mrf.mxu0
  %v418 = vadd.f32 0.0, %v417
  %v419 = vpop.f32.mrf.mxu0
  %v420 = vadd.f32 0.0, %v419
  %421 = vdwg.mxu0
  %422 = vmatpush.bf16.msra.mxu0 0
  %423 = vmatpush.bf16.msra.mxu0 0
  %424 = vmatpush.bf16.msra.mxu0 0
  %425 = vmatpush.bf16.msra.mxu0 0
  %426 = vmatpush.bf16.msra.mxu0 0
  %427 = vmatpush.bf16.msra.mxu0 0
  %428 = vmatpush.bf16.msra.mxu0 %v243
  %429 = vmatpush.bf16.msra.mxu0 %v162
  %430 = vmatmul.bf16.gmra.mxu0 %v200
  %v431 = vpop.f32.mrf.mxu0
  %v432 = vadd.f32 0.0, %v431
  %v433 = vpop.f32.mrf.mxu0
  %v434 = vadd.f32 0.0, %v433
  %435 = vdwg.mxu0
  %436 = vmatpush.bf16.msra.mxu0 0
  %437 = vmatpush.bf16.msra.mxu0 0
  %438 = vmatpush.bf16.msra.mxu0 0
  %439 = vmatpush.bf16.msra.mxu0 0
  %440 = vmatpush.bf16.msra.mxu0 0
  %441 = vmatpush.bf16.msra.mxu0 0
  %442 = vmatpush.bf16.msra.mxu0 %v246
  %443 = vmatpush.bf16.msra.mxu0 %v163
  %444 = vmatmul.bf16.gmra.mxu0 %v200
  %v445 = vpop.f32.mrf.mxu0
  %v446 = vadd.f32 0.0, %v445
  %v447 = vpop.f32.mrf.mxu0
  %v448 = vadd.f32 0.0, %v447
  %449 = vdwg.mxu0
  %450 = vmatpush.bf16.msra.mxu0 0
  %451 = vmatpush.bf16.msra.mxu0 0
  %452 = vmatpush.bf16.msra.mxu0 0
  %453 = vmatpush.bf16.msra.mxu0 0
  %454 = vmatpush.bf16.msra.mxu0 0
  %455 = vmatpush.bf16.msra.mxu0 0
  %456 = vmatpush.bf16.msra.mxu0 %v249
  %457 = vmatpush.bf16.msra.mxu0 %v164
  %458 = vmatmul.bf16.gmra.mxu0 %v200
  %v459 = vpop.f32.mrf.mxu0
  %v460 = vadd.f32 0.0, %v459
  %v461 = vpop.f32.mrf.mxu0
  %v462 = vadd.f32 0.0, %v461
  %463 = vdwg.mxu0
  %464 = vmatpush.bf16.msra.mxu0 0
  %465 = vmatpush.bf16.msra.mxu0 0
  %466 = vmatpush.bf16.msra.mxu0 0
  %467 = vmatpush.bf16.msra.mxu0 0
  %468 = vmatpush.bf16.msra.mxu0 0
  %469 = vmatpush.bf16.msra.mxu0 0
  %470 = vmatpush.bf16.msra.mxu0 %v252
  %471 = vmatpush.bf16.msra.mxu0 %v165
  %472 = vmatmul.bf16.gmra.mxu0 %v200
  %v473 = vpop.f32.mrf.mxu0
  %v474 = vadd.f32 0.0, %v473
  %v475 = vpop.f32.mrf.mxu0
  %v476 = vadd.f32 0.0, %v475
  %477 = vdwg.mxu0
  %v478 = vmax.f32 %v264, %v320
  %v479 = vmax.f32 %v278, %v334
  %v480 = vmax.f32 %v292, %v348
  %v481 = vmax.f32 %v306, %v362
  %v482 = vmax.f32 %v266, %v322
  %v483 = vmax.f32 %v280, %v336
  %v484 = vmax.f32 %v294, %v350
  %v485 = vmax.f32 %v308, %v364
  %v486 = vmax.f32 %v478, %v376
  %v487 = vmax.f32 %v479, %v390
  %v488 = vmax.f32 %v480, %v404
  %v489 = vmax.f32 %v481, %v418
  %v490 = vmax.f32 %v482, %v378
  %v491 = vmax.f32 %v483, %v392
  %v492 = vmax.f32 %v484, %v406
  %v493 = vmax.f32 %v485, %v420
  %v494 = vmax.f32 %v486, %v432
  %v495 = vmax.f32 %v487, %v446
  %v496 = vmax.f32 %v488, %v460
  %v497 = vmax.f32 %v489, %v474
  %v498 = vmax.f32 %v490, %v434
  %v499 = vmax.f32 %v491, %v448
  %v500 = vmax.f32 %v492, %v462
  %v501 = vmax.f32 %v493, %v476
  %v502 = vld [vmem:[%s2] sm:$0xff]
  %v503 = vld [vmem:[%s2 + $0x8] sm:$0xff]
  %505 = vset.pattern.permute.xlu0 0
  %506 = vperm.xlu0 %505, %v502
  %v507 = vpop.permute.xlu0 %506
  %510 = vset.pattern.permute.xlu0 0
  %511 = vperm.xlu0 %510, %v503
  %v512 = vpop.permute.xlu0 %511
  %v514 = vadd.f32 %v494, %v507
  %v515 = vadd.f32 %v495, %v507
  %v516 = vadd.f32 %v496, %v507
  %v517 = vadd.f32 %v497, %v507
  %v518 = vadd.f32 %v498, %v512
  %v519 = vadd.f32 %v499, %v512
  %v520 = vadd.f32 %v500, %v512
  %v521 = vadd.f32 %v501, %v512
  %v522 = vmax.f32 %v514, 0.0
  %v523 = vmax.f32 %v515, 0.0
  %v524 = vmax.f32 %v516, 0.0
  %v525 = vmax.f32 %v517, 0.0
  %v526 = vmax.f32 %v518, 0.0
  %v527 = vmax.f32 %v519, 0.0
  %v528 = vmax.f32 %v520, 0.0
  %v529 = vmax.f32 %v521, 0.0
  %530 = vst [vmem:[%s3] sm:$0xff] %v522
  %531 = vst [vmem:[%s3 + $0x8] sm:$0xff] %v523
  %532 = vst [vmem:[%s3 + $0x10] sm:$0xff] %v524
  %533 = vst [vmem:[%s3 + $0x18] sm:$0xff] %v525
  %534 = vst [vmem:[%s3 + $0x20] sm:$0xff] %v526
  %535 = vst [vmem:[%s3 + $0x28] sm:$0xff] %v527
  %536 = vst [vmem:[%s3 + $0x30] sm:$0xff] %v528
  %537 = vst [vmem:[%s3 + $0x38] sm:$0xff] %v529
  // Predicated region
  $region14: #{forward.2} parent=0 // pred_check
    _
  $region15: #{forward.2} parent=0 // pred_check_branch
    %539 = sbr.rel (0) target = $region17
  $region16: #{forward.2} parent=0 // pred_region
    _
  $region17: #{forward.2} parent=0 // pred_fallthru
    _
  // Predicated region
  $region18: #{forward.2} parent=0 // pred_check
    _
  $region19: #{forward.2} parent=0 // pred_check_branch
    %541 = sbr.rel (0) target = $region21
  $region20: #{forward.2} parent=0 // pred_region
    _
  $region21: #{forward.2} parent=0 // pred_fallthru
    _

// kernel: forward.3
$region0: #{forward.3}
  #allocation0 [shape = 'u32[]', space=smem, size = 0x4, offset = 0x4, fixed_abs, tag = 'smem constant byte address 0x4 - core index']
  #allocation1 [shape = 'u32[72,128]{1,0:T(1,128)}', space=vmem, size = 0x9000, scoped, tag = 'internal scratch']
  %s0 = inlined_call_operand.vmem [shape: bf16[128,144], index: 0, kind: input, shape index: {}]
  %s1 = inlined_call_operand.vmem [shape: bf16[144,32], index: 1, kind: input, shape index: {}]
  %s2 = inlined_call_operand.vmem [shape: f32[1,32], index: 2, kind: input, shape index: {}]
  %s3 = inlined_call_operand.vmem [shape: bf16[72,32], index: 3, kind: input, shape index: {}]
  %s4 = inlined_call_operand.vmem [shape: bf16[288,64], index: 4, kind: input, shape index: {}]
  %s5 = inlined_call_operand.vmem [shape: f32[1,64], index: 5, kind: input, shape index: {}]
  %s6 = inlined_call_operand.vmem [shape: f32[2,8], index: 6, kind: input, shape index: {}]
  %s7 = inlined_call_operand.vmem [shape: bf16[2,80], index: 7, kind: input, shape index: {}]
  %s8 = inlined_call_operand.vmem [shape: bf16[80,128], index: 8, kind: input, shape index: {}]
  %s9 = inlined_call_operand.vmem [shape: f32[1,128], index: 9, kind: input, shape index: {}]
  %s10 = inlined_call_operand.vmem [shape: bf16[352,32], index: 10, kind: input, shape index: {}]
  %s11 = inlined_call_operand.vmem [shape: f32[6,32], index: 11, kind: input, shape index: {}]
  %s12 = inlined_call_operand.vmem [shape: f32[2,1], index: 12, kind: output, shape index: {}]
  %s13 = sld [smem:[#allocation0]]
  $region58: #{forward.3} parent=0
    _
  %s15 = ssub.s32 1, %s13
  %s16 = scalar_select 0, %s15, %s13
  // Predicated region
  $region2: #{forward.3} parent=0 // pred_check
    _
  $region3: #{forward.3} parent=0 // pred_check_branch
    %18 = sbr.rel (0) target = $region5
  $region4: #{forward.3} parent=0 // pred_region
    _
  $region5: #{forward.3} parent=0 // pred_fallthru
    _
  // Predicated region
  $region6: #{forward.3} parent=0 // pred_check
    _
  $region7: #{forward.3} parent=0 // pred_check_branch
    %20 = sbr.rel (0) target = $region9
  $region8: #{forward.3} parent=0 // pred_region
    _
  $region9: #{forward.3} parent=0 // pred_fallthru
    _
  // Predicated region
  $region10: #{forward.3} parent=0 // pred_check
    _
  $region11: #{forward.3} parent=0 // pred_check_branch
    %22 = sbr.rel (0) target = $region13
  $region12: #{forward.3} parent=0 // pred_region
    _
  $region13: #{forward.3} parent=0 // pred_fallthru
    _
  // Predicated region
  $region14: #{forward.3} parent=0 // pred_check
    _
  $region15: #{forward.3} parent=0 // pred_check_branch
    %24 = sbr.rel (0) target = $region17
  $region16: #{forward.3} parent=0 // pred_region
    _
  $region17: #{forward.3} parent=0 // pred_fallthru
    _
  // Predicated region
  $region18: #{forward.3} parent=0 // pred_check
    _
  $region19: #{forward.3} parent=0 // pred_check_branch
    %26 = sbr.rel (0) target = $region21
  $region20: #{forward.3} parent=0 // pred_region
    _
  $region21: #{forward.3} parent=0 // pred_fallthru
    _
  // Predicated region
  $region22: #{forward.3} parent=0 // pred_check
    _
  $region23: #{forward.3} parent=0 // pred_check_branch
    %28 = sbr.rel (0) target = $region25
  $region24: #{forward.3} parent=0 // pred_region
    _
  $region25: #{forward.3} parent=0 // pred_fallthru
    _
  // Predicated region
  $region26: #{forward.3} parent=0 // pred_check
    _
  $region27: #{forward.3} parent=0 // pred_check_branch
    %30 = sbr.rel (0) target = $region29
  $region28: #{forward.3} parent=0 // pred_region
    _
  $region29: #{forward.3} parent=0 // pred_fallthru
    _
  // Predicated region
  $region30: #{forward.3} parent=0 // pred_check
    _
  $region31: #{forward.3} parent=0 // pred_check_branch
    %32 = sbr.rel (0) target = $region33
  $region32: #{forward.3} parent=0 // pred_region
    _
  $region33: #{forward.3} parent=0 // pred_fallthru
    _
  // Predicated region
  $region34: #{forward.3} parent=0 // pred_check
    _
  $region35: #{forward.3} parent=0 // pred_check_branch
    %34 = sbr.rel (0) target = $region37
  $region36: #{forward.3} parent=0 // pred_region
    _
  $region37: #{forward.3} parent=0 // pred_fallthru
    _
  // Predicated region
  $region38: #{forward.3} parent=0 // pred_check
    _
  $region39: #{forward.3} parent=0 // pred_check_branch
    %36 = sbr.rel (0) target = $region41
  $region40: #{forward.3} parent=0 // pred_region
    _
  $region41: #{forward.3} parent=0 // pred_fallthru
    _
  // Predicated region
  $region42: #{forward.3} parent=0 // pred_check
    _
  $region43: #{forward.3} parent=0 // pred_check_branch
    %38 = sbr.rel (0) target = $region45
  $region44: #{forward.3} parent=0 // pred_region
    _
  $region45: #{forward.3} parent=0 // pred_fallthru
    _
  // Predicated region
  $region46: #{forward.3} parent=0 // pred_check
    _
  $region47: #{forward.3} parent=0 // pred_check_branch
    %40 = sbr.rel (0) target = $region49
  $region48: #{forward.3} parent=0 // pred_region
    _
  $region49: #{forward.3} parent=0 // pred_fallthru
    _
  %v42 = vld [vmem:[%s0] sm:$0xff]
  %v43 = vld [vmem:[%s0 + $0x8] sm:$0xff]
  %v44 = vld [vmem:[%s0 + $0x10] sm:$0xff]
  %v45 = vld [vmem:[%s0 + $0x18] sm:$0xff]
  %v46 = vld [vmem:[%s0 + $0x20] sm:$0xff]
  %v47 = vld [vmem:[%s0 + $0x28] sm:$0xff]
  %v48 = vld [vmem:[%s0 + $0x30] sm:$0xff]
  %v49 = vld [vmem:[%s0 + $0x38] sm:$0xff]
  %v50 = vld [vmem:[%s0 + $0x40] sm:$0xff]
  %v51 = vld [vmem:[%s0 + $0x48] sm:$0xff]
  %v52 = vld [vmem:[%s0 + $0x50] sm:$0xff]
  %v53 = vld [vmem:[%s0 + $0x58] sm:$0xff]
  %v54 = vld [vmem:[%s0 + $0x60] sm:$0xff]
  %v55 = vld [vmem:[%s0 + $0x68] sm:$0xff]
  %v56 = vld [vmem:[%s0 + $0x70] sm:$0xff]
  %v57 = vld [vmem:[%s0 + $0x78] sm:$0xff]
  %v58 = vld [vmem:[%s1] sm:$0xf]
  %v59 = vld [vmem:[%s1 + $0x4] sm:$0xf]
  %v60 = vld [vmem:[%s1 + $0x8] sm:$0xf]
  %v61 = vld [vmem:[%s1 + $0xc] sm:$0xf]
  %v62 = vld [vmem:[%s1 + $0x10] sm:$0xf]
  %v63 = vld [vmem:[%s1 + $0x14] sm:$0xf]
  %v64 = vld [vmem:[%s1 + $0x18] sm:$0xf]
  %v65 = vld [vmem:[%s1 + $0x1c] sm:$0xf]
  %v66 = vld [vmem:[%s1 + $0x20] sm:$0xf]
  %v67 = vld [vmem:[%s1 + $0x24] sm:$0xf]
  %v68 = vld [vmem:[%s1 + $0x28] sm:$0xf]
  %v69 = vld [vmem:[%s1 + $0x2c] sm:$0xf]
  %v70 = vld [vmem:[%s1 + $0x30] sm:$0xf]
  %v71 = vld [vmem:[%s1 + $0x34] sm:$0xf]
  %v72 = vld [vmem:[%s1 + $0x38] sm:$0xf]
  %v73 = vld [vmem:[%s1 + $0x3c] sm:$0xf]
  %v74 = vld [vmem:[%s1 + $0x40] sm:$0xf]
  %v75 = vld [vmem:[%s1 + $0x44] sm:$0xf]
  %v92 = vunpack.c.l.b16 %v42
  %v93 = vunpack.c.h.b16 %v42
  %v94 = vunpack.c.l.b16 %v43
  %v95 = vunpack.c.h.b16 %v43
  %v96 = vunpack.c.l.b16 %v44
  %v97 = vunpack.c.h.b16 %v44
  %v98 = vunpack.c.l.b16 %v45
  %v99 = vunpack.c.h.b16 %v45
  %v100 = vunpack.c.l.b16 %v46
  %v101 = vunpack.c.h.b16 %v46
  %v102 = vunpack.c.l.b16 %v47
  %v103 = vunpack.c.h.b16 %v47
  %v104 = vunpack.c.l.b16 %v48
  %v105 = vunpack.c.h.b16 %v48
  %v106 = vunpack.c.l.b16 %v49
  %v107 = vunpack.c.h.b16 %v49
  %v108 = vunpack.c.l.b16 %v50
  %v109 = vunpack.c.h.b16 %v50
  %v110 = vunpack.c.l.b16 %v51
  %v111 = vunpack.c.h.b16 %v51
  %v112 = vunpack.c.l.b16 %v52
  %v113 = vunpack.c.h.b16 %v52
  %v114 = vunpack.c.l.b16 %v53
  %v115 = vunpack.c.h.b16 %v53
  %v116 = vunpack.c.l.b16 %v54
  %v117 = vunpack.c.h.b16 %v54
  %v118 = vunpack.c.l.b16 %v55
  %v119 = vunpack.c.h.b16 %v55
  %v120 = vunpack.c.l.b16 %v56
  %v121 = vunpack.c.h.b16 %v56
  %v122 = vunpack.c.l.b16 %v57
  %v123 = vunpack.c.h.b16 %v57
  %v124 = vpack.c.b16 %v94, %v92
  %v125 = vpack.c.b16 %v95, %v93
  %v126 = vpack.c.b16 %v98, %v96
  %v127 = vpack.c.b16 %v99, %v97
  %v128 = vpack.c.b16 %v102, %v100
  %v129 = vpack.c.b16 %v103, %v101
  %v130 = vpack.c.b16 %v106, %v104
  %v131 = vpack.c.b16 %v107, %v105
  %v132 = vpack.c.b16 %v110, %v108
  %v133 = vpack.c.b16 %v111, %v109
  %v134 = vpack.c.b16 %v114, %v112
  %v135 = vpack.c.b16 %v115, %v113
  %v136 = vpack.c.b16 %v118, %v116
  %v137 = vpack.c.b16 %v119, %v117
  %v138 = vpack.c.b16 %v122, %v120
  %v139 = vpack.c.b16 %v123, %v121
  %v166 = vunpack.c.l.b16 %v58
  %v167 = vunpack.c.l.b16 %v59
  %v168 = vunpack.c.l.b16 %v60
  %v169 = vunpack.c.l.b16 %v61
  %v170 = vunpack.c.l.b16 %v62
  %v171 = vunpack.c.l.b16 %v63
  %v172 = vunpack.c.l.b16 %v64
  %v173 = vunpack.c.l.b16 %v65
  %v174 = vunpack.c.l.b16 %v66
  %v175 = vunpack.c.l.b16 %v67
  %v176 = vunpack.c.l.b16 %v68
  %v177 = vunpack.c.l.b16 %v69
  %v178 = vunpack.c.l.b16 %v70
  %v179 = vunpack.c.l.b16 %v71
  %v180 = vunpack.c.l.b16 %v72
  %v181 = vunpack.c.l.b16 %v73
  %v182 = vunpack.c.l.b16 %v74
  %v183 = vunpack.c.l.b16 %v75
  %v184 = vpack.c.b16 %v167, %v166
  %v185 = vpack.c.b16 %v169, %v168
  %v186 = vpack.c.b16 %v171, %v170
  %v187 = vpack.c.b16 %v173, %v172
  %v188 = vpack.c.b16 %v175, %v174
  %v189 = vpack.c.b16 %v177, %v176
  %v190 = vpack.c.b16 %v179, %v178
  %v191 = vpack.c.b16 %v181, %v180
  %v192 = vpack.c.b16 %v183, %v182
  %vm202 = vcmask 130048
  %v204 = vsel %vm202, %v125, 0
  %v207 = vsel %vm202, %v127, 0
  %v210 = vsel %vm202, %v129, 0
  %v213 = vsel %vm202, %v131, 0
  %v216 = vsel %vm202, %v133, 0
  %v219 = vsel %vm202, %v135, 0
  %v222 = vsel %vm202, %v137, 0
  %v225 = vsel %vm202, %v139, 0
  %227 = vmatpush.bf16.msra.mxu0 %v191
  %228 = vmatpush.bf16.msra.mxu0 %v190
  %229 = vmatpush.bf16.msra.mxu0 %v189
  %230 = vmatpush.bf16.msra.mxu0 %v188
  %231 = vmatpush.bf16.msra.mxu0 %v187
  %232 = vmatpush.bf16.msra.mxu0 %v186
  %233 = vmatpush.bf16.msra.mxu0 %v185
  %234 = vmatpush.bf16.msra.mxu0 %v184
  %235 = vmatmul.bf16.gmra.mxu0 %v124
  %v236 = vpop.f32.mrf.mxu0
  %v237 = vadd.f32 0.0, %v236
  %v238 = vpop.f32.mrf.mxu0
  %v239 = vadd.f32 0.0, %v238
  %240 = vmatmul.bf16.gmra.mxu0 %v126
  %v241 = vpop.f32.mrf.mxu0
  %v242 = vadd.f32 0.0, %v241
  %v243 = vpop.f32.mrf.mxu0
  %v244 = vadd.f32 0.0, %v243
  %245 = vmatmul.bf16.gmra.mxu0 %v128
  %v246 = vpop.f32.mrf.mxu0
  %v247 = vadd.f32 0.0, %v246
  %v248 = vpop.f32.mrf.mxu0
  %v249 = vadd.f32 0.0, %v248
  %250 = vmatmul.bf16.gmra.mxu0 %v130
  %v251 = vpop.f32.mrf.mxu0
  %v252 = vadd.f32 0.0, %v251
  %v253 = vpop.f32.mrf.mxu0
  %v254 = vadd.f32 0.0, %v253
  %255 = vmatmul.bf16.gmra.mxu0 %v132
  %v256 = vpop.f32.mrf.mxu0
  %v257 = vadd.f32 0.0, %v256
  %v258 = vpop.f32.mrf.mxu0
  %v259 = vadd.f32 0.0, %v258
  %260 = vmatmul.bf16.gmra.mxu0 %v134
  %v261 = vpop.f32.mrf.mxu0
  %v262 = vadd.f32 0.0, %v261
  %v263 = vpop.f32.mrf.mxu0
  %v264 = vadd.f32 0.0, %v263
  %265 = vmatmul.bf16.gmra.mxu0 %v136
  %v266 = vpop.f32.mrf.mxu0
  %v267 = vadd.f32 0.0, %v266
  %v268 = vpop.f32.mrf.mxu0
  %v269 = vadd.f32 0.0, %v268
  %270 = vmatmul.bf16.gmra.mxu0 %v138
  %v271 = vpop.f32.mrf.mxu0
  %v272 = vadd.f32 0.0, %v271
  %v273 = vpop.f32.mrf.mxu0
  %v274 = vadd.f32 0.0, %v273
  %275 = vdwg.mxu0
  %276 = vmatpush.bf16.msra.mxu0 0
  %277 = vmatpush.bf16.msra.mxu0 0
  %278 = vmatpush.bf16.msra.mxu0 0
  %279 = vmatpush.bf16.msra.mxu0 0
  %280 = vmatpush.bf16.msra.mxu0 0
  %281 = vmatpush.bf16.msra.mxu0 0
  %282 = vmatpush.bf16.msra.mxu0 0
  %283 = vmatpush.bf16.msra.mxu0 %v192
  %284 = vmatmul.bf16.gmra.mxu0 %v204
  %v285 = vpop.f32.mrf.mxu0
  %v286 = vadd.f32 %v237, %v285
  %v287 = vpop.f32.mrf.mxu0
  %v288 = vadd.f32 %v239, %v287
  %289 = vmatmul.bf16.gmra.mxu0 %v207
  %v290 = vpop.f32.mrf.mxu0
  %v291 = vadd.f32 %v242, %v290
  %v292 = vpop.f32.mrf.mxu0
  %v293 = vadd.f32 %v244, %v292
  %294 = vmatmul.bf16.gmra.mxu0 %v210
  %v295 = vpop.f32.mrf.mxu0
  %v296 = vadd.f32 %v247, %v295
  %v297 = vpop.f32.mrf.mxu0
  %v298 = vadd.f32 %v249, %v297
  %299 = vmatmul.bf16.gmra.mxu0 %v213
  %v300 = vpop.f32.mrf.mxu0
  %v301 = vadd.f32 %v252, %v300
  %v302 = vpop.f32.mrf.mxu0
  %v303 = vadd.f32 %v254, %v302
  %304 = vmatmul.bf16.gmra.mxu0 %v216
  %v305 = vpop.f32.mrf.mxu0
  %v306 = vadd.f32 %v257, %v305
  %v307 = vpop.f32.mrf.mxu0
  %v308 = vadd.f32 %v259, %v307
  %309 = vmatmul.bf16.gmra.mxu0 %v219
  %v310 = vpop.f32.mrf.mxu0
  %v311 = vadd.f32 %v262, %v310
  %v312 = vpop.f32.mrf.mxu0
  %v313 = vadd.f32 %v264, %v312
  %314 = vmatmul.bf16.gmra.mxu0 %v222
  %v315 = vpop.f32.mrf.mxu0
  %v316 = vadd.f32 %v267, %v315
  %v317 = vpop.f32.mrf.mxu0
  %v318 = vadd.f32 %v269, %v317
  %319 = vmatmul.bf16.gmra.mxu0 %v225
  %v320 = vpop.f32.mrf.mxu0
  %v321 = vadd.f32 %v272, %v320
  %v322 = vpop.f32.mrf.mxu0
  %v323 = vadd.f32 %v274, %v322
  %324 = vdwg.mxu0
  %v325 = vmax.f32 %v286, %v296
  %v326 = vmax.f32 %v288, %v298
  %v327 = vmax.f32 %v291, %v301
  %v328 = vmax.f32 %v293, %v303
  %v329 = vmax.f32 %v325, %v306
  %v330 = vmax.f32 %v326, %v308
  %v331 = vmax.f32 %v327, %v311
  %v332 = vmax.f32 %v328, %v313
  %v333 = vmax.f32 %v329, %v316
  %v334 = vmax.f32 %v330, %v318
  %v335 = vmax.f32 %v331, %v321
  %v336 = vmax.f32 %v332, %v323
  %v337 = vld [vmem:[%s2] sm:$0x1]
  %v339 = vperm.slane %v337, 0
  %v341 = vadd.f32 %v333, %v339
  %v342 = vadd.f32 %v334, %v339
  %v343 = vadd.f32 %v335, %v339
  %v344 = vadd.f32 %v336, %v339
  %v345 = vmax.f32 %v341, 0.0
  %v346 = vmax.f32 %v342, 0.0
  %v347 = vmax.f32 %v343, 0.0
  %v348 = vmax.f32 %v344, 0.0
  %v349 = vpack.c.bf16 %v346, %v345
  %v350 = vpack.c.bf16 %v348, %v347
  %v351 = vld [vmem:[%s3] sm:$0xf]
  %v352 = vld [vmem:[%s3 + $0x4] sm:$0xf]
  %v353 = vld [vmem:[%s3 + $0x8] sm:$0xf]
  %v354 = vld [vmem:[%s3 + $0xc] sm:$0xf]
  %v355 = vld [vmem:[%s3 + $0x10] sm:$0xf]
  %v356 = vld [vmem:[%s3 + $0x14] sm:$0xf]
  %v357 = vld [vmem:[%s3 + $0x18] sm:$0xf]
  %v358 = vld [vmem:[%s3 + $0x1c] sm:$0xf]
  %v359 = vld [vmem:[%s3 + $0x20] sm:$0xf]
  %v369 = vunpack.c.l.b16 %v351
  %v370 = vunpack.c.l.b16 %v352
  %v371 = vunpack.c.l.b16 %v353
  %v372 = vunpack.c.l.b16 %v354
  %v373 = vunpack.c.l.b16 %v355
  %v374 = vunpack.c.l.b16 %v356
  %v375 = vunpack.c.l.b16 %v357
  %v376 = vunpack.c.l.b16 %v358
  %v377 = vunpack.c.l.b16 %v359
  %v378 = vpack.c.b16 %v370, %v369
  %v379 = vpack.c.b16 %v372, %v371
  %v380 = vpack.c.b16 %v374, %v373
  %v381 = vpack.c.b16 %v376, %v375
  %v382 = vpack.c.b16 %v377, %v377
  %vm383 = vcmask 261120
  %v385 = vsel %vm383, %v378, 0
  %v388 = vsel %vm383, %v379, 0
  %v391 = vsel %vm383, %v380, 0
  %v394 = vsel %vm383, %v381, 0
  %v397 = vsel %vm383, %v382, 0
  %399 = vmatpush.bf16.msra.mxu0 0
  %400 = vmatpush.bf16.msra.mxu0 0
  %401 = vmatpush.bf16.msra.mxu0 0
  %402 = vmatpush.bf16.msra.mxu0 0
  %403 = vmatpush.bf16.msra.mxu0 0
  %404 = vmatpush.bf16.msra.mxu0 0
  %405 = vmatpush.bf16.msra.mxu0 %v350
  %406 = vmatpush.bf16.msra.mxu0 %v349
  %407 = vmatmul.bf16.gmra.mxu0 %v385
  %v408 = vpop.f32.mrf.mxu0
  %v409 = vadd.f32 0.0, %v408
  %v410 = vpop.f32.mrf.mxu0
  %v411 = vadd.f32 0.0, %v410
  %412 = vmatmul.bf16.gmra.mxu0 %v388
  %v413 = vpop.f32.mrf.mxu0
  %v414 = vadd.f32 0.0, %v413
  %v415 = vpop.f32.mrf.mxu0
  %v416 = vadd.f32 0.0, %v415
  %417 = vmatmul.bf16.gmra.mxu0 %v391
  %v418 = vpop.f32.mrf.mxu0
  %v419 = vadd.f32 0.0, %v418
  %v420 = vpop.f32.mrf.mxu0
  %v421 = vadd.f32 0.0, %v420
  %422 = vmatmul.bf16.gmra.mxu0 %v394
  %v423 = vpop.f32.mrf.mxu0
  %v424 = vadd.f32 0.0, %v423
  %v425 = vpop.f32.mrf.mxu0
  %v426 = vadd.f32 0.0, %v425
  %427 = vmatmul.bf16.gmra.mxu0 %v397
  %v428 = vpop.f32.mrf.mxu0
  %v429 = vadd.f32 0.0, %v428
  %v430 = vpop.f32.mrf.mxu0
  %431 = vdwg.mxu0
  %v432 = vpack.c.bf16 %v409, %v409
  %v433 = vpack.c.bf16 %v411, %v411
  %v434 = vpack.c.bf16 %v414, %v414
  %v435 = vpack.c.bf16 %v416, %v416
  %v436 = vpack.c.bf16 %v419, %v419
  %v437 = vpack.c.bf16 %v421, %v421
  %v438 = vpack.c.bf16 %v424, %v424
  %v439 = vpack.c.bf16 %v426, %v426
  %v440 = vpack.c.bf16 %v429, %v429
  %v441 = vld [vmem:[%s4] sm:$0xf]
  %v442 = vld [vmem:[%s4 + $0x4] sm:$0xf]
  %v443 = vld [vmem:[%s4 + $0x8] sm:$0xf]
  %v444 = vld [vmem:[%s4 + $0xc] sm:$0xf]
  %v445 = vld [vmem:[%s4 + $0x10] sm:$0xf]
  %v446 = vld [vmem:[%s4 + $0x14] sm:$0xf]
  %v447 = vld [vmem:[%s4 + $0x18] sm:$0xf]
  %v448 = vld [vmem:[%s4 + $0x1c] sm:$0xf]
  %v453 = vunpack.c.l.b16 %v445
  %v454 = vunpack.c.l.b16 %v446
  %v455 = vunpack.c.l.b16 %v447
  %v456 = vunpack.c.l.b16 %v448
  %v457 = vpack.c.b16 %v454, %v453
  %v458 = vpack.c.b16 %v456, %v455
  %v462 = vsel %vm383, %v433, 0
  %464 = vmatpush.bf16.msra.mxu0 0
  %465 = vmatpush.bf16.msra.mxu0 0
  %466 = vmatpush.bf16.msra.mxu0 0
  %467 = vmatpush.bf16.msra.mxu0 0
  %468 = vmatpush.bf16.msra.mxu0 0
  %469 = vmatpush.bf16.msra.mxu0 0
  %470 = vmatpush.bf16.msra.mxu0 %v458
  %471 = vmatpush.bf16.msra.mxu0 %v457
  %472 = vmatmul.bf16.gmra.mxu0 %v462
  %v473 = vpop.f32.mrf.mxu0
  %v474 = vadd.f32 0.0, %v473
  %v475 = vpop.f32.mrf.mxu0
  %476 = vdwg.mxu0
  %v481 = vunpack.c.l.b16 %v441
  %v482 = vunpack.c.l.b16 %v442
  %v483 = vunpack.c.l.b16 %v443
  %v484 = vunpack.c.l.b16 %v444
  %v485 = vpack.c.b16 %v482, %v481
  %v486 = vpack.c.b16 %v484, %v483
  %v490 = vsel %vm383, %v432, 0
  %492 = vmatpush.bf16.msra.mxu0 0
  %493 = vmatpush.bf16.msra.mxu0 0
  %494 = vmatpush.bf16.msra.mxu0 0
  %495 = vmatpush.bf16.msra.mxu0 0
  %496 = vmatpush.bf16.msra.mxu0 0
  %497 = vmatpush.bf16.msra.mxu0 0
  %498 = vmatpush.bf16.msra.mxu0 %v486
  %499 = vmatpush.bf16.msra.mxu0 %v485
  %500 = vmatmul.bf16.gmra.mxu0 %v490
  %v501 = vpop.f32.mrf.mxu0
  %v502 = vadd.f32 %v474, %v501
  %v503 = vpop.f32.mrf.mxu0
  %504 = vdwg.mxu0
  %v505 = vld [vmem:[%s4 + $0x20] sm:$0xf]
  %v506 = vld [vmem:[%s4 + $0x24] sm:$0xf]
  %v507 = vld [vmem:[%s4 + $0x28] sm:$0xf]
  %v508 = vld [vmem:[%s4 + $0x2c] sm:$0xf]
  %v513 = vunpack.c.l.b16 %v505
  %v514 = vunpack.c.l.b16 %v506
  %v515 = vunpack.c.l.b16 %v507
  %v516 = vunpack.c.l.b16 %v508
  %v517 = vpack.c.b16 %v514, %v513
  %v518 = vpack.c.b16 %v516, %v515
  %v522 = vsel %vm383, %v434, 0
  %524 = vmatpush.bf16.msra.mxu0 0
  %525 = vmatpush.bf16.msra.mxu0 0
  %526 = vmatpush.bf16.msra.mxu0 0
  %527 = vmatpush.bf16.msra.mxu0 0
  %528 = vmatpush.bf16.msra.mxu0 0
  %529 = vmatpush.bf16.msra.mxu0 0
  %530 = vmatpush.bf16.msra.mxu0 %v518
  %531 = vmatpush.bf16.msra.mxu0 %v517
  %532 = vmatmul.bf16.gmra.mxu0 %v522
  %v533 = vpop.f32.mrf.mxu0
  %v534 = vadd.f32 0.0, %v533
  %v535 = vpop.f32.mrf.mxu0
  %536 = vdwg.mxu0
  %v537 = vadd.f32 %v502, %v534
  %v538 = vld [vmem:[%s4 + $0x30] sm:$0xf]
  %v539 = vld [vmem:[%s4 + $0x34] sm:$0xf]
  %v540 = vld [vmem:[%s4 + $0x38] sm:$0xf]
  %v541 = vld [vmem:[%s4 + $0x3c] sm:$0xf]
  %v546 = vunpack.c.l.b16 %v538
  %v547 = vunpack.c.l.b16 %v539
  %v548 = vunpack.c.l.b16 %v540
  %v549 = vunpack.c.l.b16 %v541
  %v550 = vpack.c.b16 %v547, %v546
  %v551 = vpack.c.b16 %v549, %v548
  %v555 = vsel %vm383, %v435, 0
  %557 = vmatpush.bf16.msra.mxu0 0
  %558 = vmatpush.bf16.msra.mxu0 0
  %559 = vmatpush.bf16.msra.mxu0 0
  %560 = vmatpush.bf16.msra.mxu0 0
  %561 = vmatpush.bf16.msra.mxu0 0
  %562 = vmatpush.bf16.msra.mxu0 0
  %563 = vmatpush.bf16.msra.mxu0 %v551
  %564 = vmatpush.bf16.msra.mxu0 %v550
  %565 = vmatmul.bf16.gmra.mxu0 %v555
  %v566 = vpop.f32.mrf.mxu0
  %v567 = vadd.f32 0.0, %v566
  %v568 = vpop.f32.mrf.mxu0
  %569 = vdwg.mxu0
  %v570 = vadd.f32 %v537, %v567
  %v571 = vld [vmem:[%s4 + $0x40] sm:$0xf]
  %v572 = vld [vmem:[%s4 + $0x44] sm:$0xf]
  %v573 = vld [vmem:[%s4 + $0x48] sm:$0xf]
  %v574 = vld [vmem:[%s4 + $0x4c] sm:$0xf]
  %v579 = vunpack.c.l.b16 %v571
  %v580 = vunpack.c.l.b16 %v572
  %v581 = vunpack.c.l.b16 %v573
  %v582 = vunpack.c.l.b16 %v574
  %v583 = vpack.c.b16 %v580, %v579
  %v584 = vpack.c.b16 %v582, %v581
  %v588 = vsel %vm383, %v436, 0
  %590 = vmatpush.bf16.msra.mxu0 0
  %591 = vmatpush.bf16.msra.mxu0 0
  %592 = vmatpush.bf16.msra.mxu0 0
  %593 = vmatpush.bf16.msra.mxu0 0
  %594 = vmatpush.bf16.msra.mxu0 0
  %595 = vmatpush.bf16.msra.mxu0 0
  %596 = vmatpush.bf16.msra.mxu0 %v584
  %597 = vmatpush.bf16.msra.mxu0 %v583
  %598 = vmatmul.bf16.gmra.mxu0 %v588
  %v599 = vpop.f32.mrf.mxu0
  %v600 = vadd.f32 0.0, %v599
  %v601 = vpop.f32.mrf.mxu0
  %602 = vdwg.mxu0
  %v603 = vadd.f32 %v570, %v600
  %v604 = vld [vmem:[%s4 + $0x50] sm:$0xf]
  %v605 = vld [vmem:[%s4 + $0x54] sm:$0xf]
  %v606 = vld [vmem:[%s4 + $0x58] sm:$0xf]
  %v607 = vld [vmem:[%s4 + $0x5c] sm:$0xf]
  %v612 = vunpack.c.l.b16 %v604
  %v613 = vunpack.c.l.b16 %v605
  %v614 = vunpack.c.l.b16 %v606
  %v615 = vunpack.c.l.b16 %v607
  %v616 = vpack.c.b16 %v613, %v612
  %v617 = vpack.c.b16 %v615, %v614
  %v621 = vsel %vm383, %v437, 0
  %623 = vmatpush.bf16.msra.mxu0 0
  %624 = vmatpush.bf16.msra.mxu0 0
  %625 = vmatpush.bf16.msra.mxu0 0
  %626 = vmatpush.bf16.msra.mxu0 0
  %627 = vmatpush.bf16.msra.mxu0 0
  %628 = vmatpush.bf16.msra.mxu0 0
  %629 = vmatpush.bf16.msra.mxu0 %v617
  %630 = vmatpush.bf16.msra.mxu0 %v616
  %631 = vmatmul.bf16.gmra.mxu0 %v621
  %v632 = vpop.f32.mrf.mxu0
  %v633 = vadd.f32 0.0, %v632
  %v634 = vpop.f32.mrf.mxu0
  %635 = vdwg.mxu0
  %v636 = vadd.f32 %v603, %v633
  %v637 = vld [vmem:[%s4 + $0x60] sm:$0xf]
  %v638 = vld [vmem:[%s4 + $0x64] sm:$0xf]
  %v639 = vld [vmem:[%s4 + $0x68] sm:$0xf]
  %v640 = vld [vmem:[%s4 + $0x6c] sm:$0xf]
  %v645 = vunpack.c.l.b16 %v637
  %v646 = vunpack.c.l.b16 %v638
  %v647 = vunpack.c.l.b16 %v639
  %v648 = vunpack.c.l.b16 %v640
  %v649 = vpack.c.b16 %v646, %v645
  %v650 = vpack.c.b16 %v648, %v647
  %v654 = vsel %vm383, %v438, 0
  %656 = vmatpush.bf16.msra.mxu0 0
  %657 = vmatpush.bf16.msra.mxu0 0
  %658 = vmatpush.bf16.msra.mxu0 0
  %659 = vmatpush.bf16.msra.mxu0 0
  %660 = vmatpush.bf16.msra.mxu0 0
  %661 = vmatpush.bf16.msra.mxu0 0
  %662 = vmatpush.bf16.msra.mxu0 %v650
  %663 = vmatpush.bf16.msra.mxu0 %v649
  %664 = vmatmul.bf16.gmra.mxu0 %v654
  %v665 = vpop.f32.mrf.mxu0
  %v666 = vadd.f32 0.0, %v665
  %v667 = vpop.f32.mrf.mxu0
  %668 = vdwg.mxu0
  %v669 = vadd.f32 %v636, %v666
  %v670 = vld [vmem:[%s4 + $0x70] sm:$0xf]
  %v671 = vld [vmem:[%s4 + $0x74] sm:$0xf]
  %v672 = vld [vmem:[%s4 + $0x78] sm:$0xf]
  %v673 = vld [vmem:[%s4 + $0x7c] sm:$0xf]
  %v678 = vunpack.c.l.b16 %v670
  %v679 = vunpack.c.l.b16 %v671
  %v680 = vunpack.c.l.b16 %v672
  %v681 = vunpack.c.l.b16 %v673
  %v682 = vpack.c.b16 %v679, %v678
  %v683 = vpack.c.b16 %v681, %v680
  %v687 = vsel %vm383, %v439, 0
  %689 = vmatpush.bf16.msra.mxu0 0
  %690 = vmatpush.bf16.msra.mxu0 0
  %691 = vmatpush.bf16.msra.mxu0 0
  %692 = vmatpush.bf16.msra.mxu0 0
  %693 = vmatpush.bf16.msra.mxu0 0
  %694 = vmatpush.bf16.msra.mxu0 0
  %695 = vmatpush.bf16.msra.mxu0 %v683
  %696 = vmatpush.bf16.msra.mxu0 %v682
  %697 = vmatmul.bf16.gmra.mxu0 %v687
  %v698 = vpop.f32.mrf.mxu0
  %v699 = vadd.f32 0.0, %v698
  %v700 = vpop.f32.mrf.mxu0
  %701 = vdwg.mxu0
  %v702 = vadd.f32 %v669, %v699
  %v703 = vld [vmem:[%s4 + $0x80] sm:$0xf]
  %v704 = vld [vmem:[%s4 + $0x84] sm:$0xf]
  %v705 = vld [vmem:[%s4 + $0x88] sm:$0xf]
  %v706 = vld [vmem:[%s4 + $0x8c] sm:$0xf]
  %v711 = vunpack.c.l.b16 %v703
  %v712 = vunpack.c.l.b16 %v704
  %v713 = vunpack.c.l.b16 %v705
  %v714 = vunpack.c.l.b16 %v706
  %v715 = vpack.c.b16 %v712, %v711
  %v716 = vpack.c.b16 %v714, %v713
  %v720 = vsel %vm383, %v440, 0
  %722 = vmatpush.bf16.msra.mxu0 0
  %723 = vmatpush.bf16.msra.mxu0 0
  %724 = vmatpush.bf16.msra.mxu0 0
  %725 = vmatpush.bf16.msra.mxu0 0
  %726 = vmatpush.bf16.msra.mxu0 0
  %727 = vmatpush.bf16.msra.mxu0 0
  %728 = vmatpush.bf16.msra.mxu0 %v716
  %729 = vmatpush.bf16.msra.mxu0 %v715
  %730 = vmatmul.bf16.gmra.mxu0 %v720
  %v731 = vpop.f32.mrf.mxu0
  %v732 = vadd.f32 0.0, %v731
  %v733 = vpop.f32.mrf.mxu0
  %734 = vdwg.mxu0
  %v735 = vadd.f32 %v702, %v732
  %v736 = vld [vmem:[%s5] sm:$0x1]
  %v738 = vperm.slane %v736, 0
  %v740 = vadd.f32 %v735, %v738
  %v741 = vmax.f32 %v740, 0.0
  %v742 = vld [vmem:[%s6] sm:$0x3]
  %vm743 = vcmask 64512
  %v745 = vsel %vm743, %v742, 0
  %747 = vmatpush.msra.mxu0 0.0
  %748 = vmatpush.msra.mxu0 0.0
  %749 = vmatpush.msra.mxu0 0.0
  %750 = vmatpush.msra.mxu0 0.0
  %751 = vmatpush.msra.mxu0 0.0
  %752 = vmatpush.msra.mxu0 0.0
  %753 = vmatpush.msra.mxu0 0.0
  %754 = vmatpush.msra.mxu0 0.0
  %755 = vmatpush.msra.mxu0 0.0
  %756 = vmatpush.msra.mxu0 0.0
  %757 = vmatpush.msra.mxu0 0.0
  %758 = vmatpush.msra.mxu0 0.0
  %759 = vmatpush.msra.mxu0 0.0
  %760 = vmatpush.msra.mxu0 0.0
  %761 = vmatpush.msra.mxu0 0.0
  %762 = vmatpush.msra.mxu0 %v741
  %763 = vmatmul.f32.gmra.mxu0 %v745
  %v764 = vpop.f32.mrf.mxu0
  %v765 = vadd.f32 0.0, %v764
  %766 = vdwg.mxu0
  %v767 = vpack.c.bf16 %v765, %v765
  %v768 = vld [vmem:[%s10] sm:$0xf]
  %v769 = vld [vmem:[%s10 + $0x4] sm:$0xf]
  %v770 = vld [vmem:[%s10 + $0x8] sm:$0xf]
  %v771 = vld [vmem:[%s10 + $0xc] sm:$0xf]
  %v772 = vld [vmem:[%s10 + $0x10] sm:$0xf]
  %v773 = vld [vmem:[%s10 + $0x14] sm:$0xf]
  %v774 = vld [vmem:[%s10 + $0x18] sm:$0xf]
  %v775 = vld [vmem:[%s10 + $0x1c] sm:$0xf]
  %v776 = vld [vmem:[%s11] sm:$0x1]
  %v777 = vperm.slane %v776, 0
  %v786 = vunpack.c.l.b16 %v768
  %v787 = vunpack.c.l.b16 %v769
  %v788 = vunpack.c.l.b16 %v770
  %v789 = vunpack.c.l.b16 %v771
  %v790 = vunpack.c.l.b16 %v772
  %v791 = vunpack.c.l.b16 %v773
  %v792 = vunpack.c.l.b16 %v774
  %v793 = vunpack.c.l.b16 %v775
  %v794 = vpack.c.b16 %v787, %v786
  %v795 = vpack.c.b16 %v789, %v788
  %v796 = vpack.c.b16 %v791, %v790
  %v797 = vpack.c.b16 %v793, %v792
  %vm802 = vcmask 523264
  %v804 = vsel %vm802, %v767, 0
  %806 = vmatpush.bf16.msra.mxu0 0
  %807 = vmatpush.bf16.msra.mxu0 0
  %808 = vmatpush.bf16.msra.mxu0 0
  %809 = vmatpush.bf16.msra.mxu0 0
  %810 = vmatpush.bf16.msra.mxu0 %v797
  %811 = vmatpush.bf16.msra.mxu0 %v796
  %812 = vmatpush.bf16.msra.mxu0 %v795
  %813 = vmatpush.bf16.msra.mxu0 %v794
  %814 = vmatmul.bf16.gmra.mxu0 %v804
  %v815 = vpop.f32.mrf.mxu0
  %v816 = vadd.f32 %v777, %v815
  %v817 = vpop.f32.mrf.mxu0
  %818 = vdwg.mxu0
  %v819 = vpack.c.bf16 %v816, %v816
  %v820 = vld [vmem:[%s10 + $0x20] sm:$0xf]
  %v821 = vld [vmem:[%s10 + $0x24] sm:$0xf]
  %v822 = vld [vmem:[%s10 + $0x28] sm:$0xf]
  %v823 = vld [vmem:[%s10 + $0x2c] sm:$0xf]
  %v824 = vld [vmem:[%s11 + $0x1] sm:$0x1]
  %v825 = vperm.slane %v824, 0
  %v830 = vunpack.c.l.b16 %v820
  %v831 = vunpack.c.l.b16 %v821
  %v832 = vunpack.c.l.b16 %v822
  %v833 = vunpack.c.l.b16 %v823
  %v834 = vpack.c.b16 %v831, %v830
  %v835 = vpack.c.b16 %v833, %v832
  %v839 = vsel %vm383, %v819, 0
  %841 = vmatpush.bf16.msra.mxu0 0
  %842 = vmatpush.bf16.msra.mxu0 0
  %843 = vmatpush.bf16.msra.mxu0 0
  %844 = vmatpush.bf16.msra.mxu0 0
  %845 = vmatpush.bf16.msra.mxu0 0
  %846 = vmatpush.bf16.msra.mxu0 0
  %847 = vmatpush.bf16.msra.mxu0 %v835
  %848 = vmatpush.bf16.msra.mxu0 %v834
  %849 = vmatmul.bf16.gmra.mxu0 %v839
  %v850 = vpop.f32.mrf.mxu0
  %v851 = vadd.f32 %v825, %v850
  %v852 = vpop.f32.mrf.mxu0
  %853 = vdwg.mxu0
  %v854 = vpack.c.bf16 %v851, %v851
  %v855 = vld [vmem:[%s10 + $0x30] sm:$0xf]
  %v856 = vld [vmem:[%s10 + $0x34] sm:$0xf]
  %v857 = vld [vmem:[%s10 + $0x38] sm:$0xf]
  %v858 = vld [vmem:[%s10 + $0x3c] sm:$0xf]
  %v859 = vld [vmem:[%s10 + $0x40] sm:$0xf]
  %v860 = vld [vmem:[%s10 + $0x44] sm:$0xf]
  %v861 = vld [vmem:[%s10 + $0x48] sm:$0xf]
  %v862 = vld [vmem:[%s10 + $0x4c] sm:$0xf]
  %v867 = vunpack.c.l.b16 %v859
  %v868 = vunpack.c.l.b16 %v860
  %v869 = vunpack.c.l.b16 %v861
  %v870 = vunpack.c.l.b16 %v862
  %v871 = vpack.c.b16 %v868, %v867
  %v872 = vpack.c.b16 %v870, %v869
  %875 = vmatpush.bf16.msra.mxu0 0
  %876 = vmatpush.bf16.msra.mxu0 0
  %877 = vmatpush.bf16.msra.mxu0 0
  %878 = vmatpush.bf16.msra.mxu0 0
  %879 = vmatpush.bf16.msra.mxu0 0
  %880 = vmatpush.bf16.msra.mxu0 0
  %881 = vmatpush.bf16.msra.mxu0 %v872
  %882 = vmatpush.bf16.msra.mxu0 %v871
  %883 = vmatmul.bf16.gmra.mxu0 %v839
  %v884 = vpop.f32.mrf.mxu0
  %v885 = vadd.f32 0.0, %v884
  %v886 = vpop.f32.mrf.mxu0
  %887 = vdwg.mxu0
  %v892 = vunpack.c.l.b16 %v855
  %v893 = vunpack.c.l.b16 %v856
  %v894 = vunpack.c.l.b16 %v857
  %v895 = vunpack.c.l.b16 %v858
  %v896 = vpack.c.b16 %v893, %v892
  %v897 = vpack.c.b16 %v895, %v894
  %v901 = vsel %vm383, %v854, 0
  %903 = vmatpush.bf16.msra.mxu0 0
  %904 = vmatpush.bf16.msra.mxu0 0
  %905 = vmatpush.bf16.msra.mxu0 0
  %906 = vmatpush.bf16.msra.mxu0 0
  %907 = vmatpush.bf16.msra.mxu0 0
  %908 = vmatpush.bf16.msra.mxu0 0
  %909 = vmatpush.bf16.msra.mxu0 %v897
  %910 = vmatpush.bf16.msra.mxu0 %v896
  %911 = vmatmul.bf16.gmra.mxu0 %v901
  %v912 = vpop.f32.mrf.mxu0
  %v913 = vadd.f32 %v885, %v912
  %v914 = vpop.f32.mrf.mxu0
  %915 = vdwg.mxu0
  %v916 = vld [vmem:[%s11 + $0x2] sm:$0x1]
  %v917 = vperm.slane %v916, 0
  %v918 = vadd.f32 %v913, %v917
  %v919 = vmax.f32 %v918, 0.0
  %v920 = vpack.c.bf16 %v919, %v919
  %v921 = vld [vmem:[%s10 + $0x50] sm:$0xf]
  %v922 = vld [vmem:[%s10 + $0x54] sm:$0xf]
  %v923 = vld [vmem:[%s10 + $0x58] sm:$0xf]
  %v924 = vld [vmem:[%s10 + $0x5c] sm:$0xf]
  %v925 = vld [vmem:[%s11 + $0x3] sm:$0x1]
  %v926 = vperm.slane %v925, 0
  %v931 = vunpack.c.l.b16 %v921
  %v932 = vunpack.c.l.b16 %v922
  %v933 = vunpack.c.l.b16 %v923
  %v934 = vunpack.c.l.b16 %v924
  %v935 = vpack.c.b16 %v932, %v931
  %v936 = vpack.c.b16 %v934, %v933
  %v940 = vsel %vm383, %v920, 0
  %942 = vmatpush.bf16.msra.mxu0 0
  %943 = vmatpush.bf16.msra.mxu0 0
  %944 = vmatpush.bf16.msra.mxu0 0
  %945 = vmatpush.bf16.msra.mxu0 0
  %946 = vmatpush.bf16.msra.mxu0 0
  %947 = vmatpush.bf16.msra.mxu0 0
  %948 = vmatpush.bf16.msra.mxu0 %v936
  %949 = vmatpush.bf16.msra.mxu0 %v935
  %950 = vmatmul.bf16.gmra.mxu0 %v940
  %v951 = vpop.f32.mrf.mxu0
  %v952 = vadd.f32 %v926, %v951
  %v953 = vpop.f32.mrf.mxu0
  %954 = vdwg.mxu0
  %v955 = vmax.f32 %v952, 0.0
  %v956 = vld [vmem:[%s7] sm:$0x1]
  %v957 = vld [vmem:[%s8] sm:$0xf]
  %v958 = vld [vmem:[%s8 + $0x4] sm:$0xf]
  %v959 = vld [vmem:[%s8 + $0x8] sm:$0xf]
  %v960 = vld [vmem:[%s8 + $0xc] sm:$0xf]
  %v961 = vld [vmem:[%s8 + $0x10] sm:$0xf]
  %v962 = vld [vmem:[%s8 + $0x14] sm:$0xf]
  %v963 = vld [vmem:[%s8 + $0x18] sm:$0xf]
  %v964 = vld [vmem:[%s8 + $0x1c] sm:$0xf]
  %v965 = vld [vmem:[%s8 + $0x20] sm:$0xf]
  %v966 = vld [vmem:[%s8 + $0x24] sm:$0xf]
  %v967 = vld [vmem:[%s9] sm:$0x1]
  %v969 = vperm.slane %v967, 0
  %v981 = vunpack.c.l.b16 %v957
  %v982 = vunpack.c.l.b16 %v958
  %v983 = vunpack.c.l.b16 %v959
  %v984 = vunpack.c.l.b16 %v960
  %v985 = vunpack.c.l.b16 %v961
  %v986 = vunpack.c.l.b16 %v962
  %v987 = vunpack.c.l.b16 %v963
  %v988 = vunpack.c.l.b16 %v964
  %v989 = vunpack.c.l.b16 %v965
  %v990 = vunpack.c.l.b16 %v966
  %v991 = vpack.c.b16 %v982, %v981
  %v992 = vpack.c.b16 %v984, %v983
  %v993 = vpack.c.b16 %v986, %v985
  %v994 = vpack.c.b16 %v988, %v987
  %v995 = vpack.c.b16 %v990, %v989
  %vm1001 = vcmask 654336
  %v1003 = vsel %vm1001, %v956, 0
  %1005 = vmatpush.bf16.msra.mxu0 0
  %1006 = vmatpush.bf16.msra.mxu0 0
  %1007 = vmatpush.bf16.msra.mxu0 0
  %1008 = vmatpush.bf16.msra.mxu0 %v995
  %1009 = vmatpush.bf16.msra.mxu0 %v994
  %1010 = vmatpush.bf16.msra.mxu0 %v993
  %1011 = vmatpush.bf16.msra.mxu0 %v992
  %1012 = vmatpush.bf16.msra.mxu0 %v991
  %1013 = vmatmul.bf16.gmra.mxu0 %v1003
  %v1014 = vpop.f32.mrf.mxu0
  %v1015 = vadd.f32 %v969, %v1014
  %v1016 = vpop.f32.mrf.mxu0
  %1017 = vdwg.mxu0
  %v1018 = vmax.f32 %v1015, 0.0
  %v1019 = vpack.c.bf16 %v955, %v955
  %v1020 = vld [vmem:[%s10 + $0x60] sm:$0xf]
  %v1021 = vld [vmem:[%s10 + $0x64] sm:$0xf]
  %v1022 = vld [vmem:[%s10 + $0x68] sm:$0xf]
  %v1023 = vld [vmem:[%s10 + $0x6c] sm:$0xf]
  %v1024 = vld [vmem:[%s11 + $0x4] sm:$0x1]
  %v1025 = vperm.slane %v1024, 0
  %v1030 = vunpack.c.l.b16 %v1020
  %v1031 = vunpack.c.l.b16 %v1021
  %v1032 = vunpack.c.l.b16 %v1022
  %v1033 = vunpack.c.l.b16 %v1023
  %v1034 = vpack.c.b16 %v1031, %v1030
  %v1035 = vpack.c.b16 %v1033, %v1032
  %v1039 = vsel %vm383, %v1019, 0
  %1041 = vmatpush.bf16.msra.mxu0 0
  %1042 = vmatpush.bf16.msra.mxu0 0
  %1043 = vmatpush.bf16.msra.mxu0 0
  %1044 = vmatpush.bf16.msra.mxu0 0
  %1045 = vmatpush.bf16.msra.mxu0 0
  %1046 = vmatpush.bf16.msra.mxu0 0
  %1047 = vmatpush.bf16.msra.mxu0 %v1035
  %1048 = vmatpush.bf16.msra.mxu0 %v1034
  %1049 = vmatmul.bf16.gmra.mxu0 %v1039
  %v1050 = vpop.f32.mrf.mxu0
  %v1051 = vadd.f32 %v1025, %v1050
  %v1052 = vpop.f32.mrf.mxu0
  %1053 = vdwg.mxu0
  %v1054 = vtanh.pop %v1051
  %v1055 = vpack.c.bf16 %v1018, %v1018
  %v1056 = vld [vmem:[%s10 + $0x70] sm:$0xf]
  %v1057 = vld [vmem:[%s10 + $0x74] sm:$0xf]
  %v1058 = vld [vmem:[%s10 + $0x78] sm:$0xf]
  %v1059 = vld [vmem:[%s10 + $0x7c] sm:$0xf]
  %v1060 = vld [vmem:[%s10 + $0x80] sm:$0xf]
  %v1061 = vld [vmem:[%s10 + $0x84] sm:$0xf]
  %v1062 = vld [vmem:[%s10 + $0x88] sm:$0xf]
  %v1063 = vld [vmem:[%s10 + $0x8c] sm:$0xf]
  %v1064 = vld [vmem:[%s10 + $0x90] sm:$0xf]
  %v1065 = vld [vmem:[%s10 + $0x94] sm:$0xf]
  %v1066 = vld [vmem:[%s10 + $0x98] sm:$0xf]
  %v1067 = vld [vmem:[%s10 + $0x9c] sm:$0xf]
  %v1068 = vld [vmem:[%s10 + $0xa0] sm:$0xf]
  %v1069 = vld [vmem:[%s10 + $0xa4] sm:$0xf]
  %v1070 = vld [vmem:[%s10 + $0xa8] sm:$0xf]
  %v1071 = vld [vmem:[%s10 + $0xac] sm:$0xf]
  %v1072 = vld [vmem:[%s11 + $0x5] sm:$0x1]
  %v1073 = vperm.slane %v1072, 0
  %v1090 = vunpack.c.l.b16 %v1056
  %v1091 = vunpack.c.l.b16 %v1057
  %v1092 = vunpack.c.l.b16 %v1058
  %v1093 = vunpack.c.l.b16 %v1059
  %v1094 = vunpack.c.l.b16 %v1060
  %v1095 = vunpack.c.l.b16 %v1061
  %v1096 = vunpack.c.l.b16 %v1062
  %v1097 = vunpack.c.l.b16 %v1063
  %v1098 = vunpack.c.l.b16 %v1064
  %v1099 = vunpack.c.l.b16 %v1065
  %v1100 = vunpack.c.l.b16 %v1066
  %v1101 = vunpack.c.l.b16 %v1067
  %v1102 = vunpack.c.l.b16 %v1068
  %v1103 = vunpack.c.l.b16 %v1069
  %v1104 = vunpack.c.l.b16 %v1070
  %v1105 = vunpack.c.l.b16 %v1071
  %v1106 = vpack.c.b16 %v1091, %v1090
  %v1107 = vpack.c.b16 %v1093, %v1092
  %v1108 = vpack.c.b16 %v1095, %v1094
  %v1109 = vpack.c.b16 %v1097, %v1096
  %v1110 = vpack.c.b16 %v1099, %v1098
  %v1111 = vpack.c.b16 %v1101, %v1100
  %v1112 = vpack.c.b16 %v1103, %v1102
  %v1113 = vpack.c.b16 %v1105, %v1104
  %1122 = vmatpush.bf16.msra.mxu0 %v1113
  %1123 = vmatpush.bf16.msra.mxu0 %v1112
  %1124 = vmatpush.bf16.msra.mxu0 %v1111
  %1125 = vmatpush.bf16.msra.mxu0 %v1110
  %1126 = vmatpush.bf16.msra.mxu0 %v1109
  %1127 = vmatpush.bf16.msra.mxu0 %v1108
  %1128 = vmatpush.bf16.msra.mxu0 %v1107
  %1129 = vmatpush.bf16.msra.mxu0 %v1106
  %1130 = vmatmul.bf16.gmra.mxu0 %v1055
  %v1131 = vpop.f32.mrf.mxu0
  %v1132 = vadd.f32 %v1073, %v1131
  %v1133 = vpop.f32.mrf.mxu0
  %1134 = vdwg.mxu0
  %v1135 = vtanh.pop %v1132
  %v1136 = vmul.f32 %v1135, %v1054
  %vm1137 = vcmask 254976
  %v1138 = vsel %vm1137, %v1136, 0.0
  %1139 = vadd.xlane.f32.xlu0 %v1138
  %v1140 = vpop.xlane.xlu0 %1139
  %vm1141 = vcmask 1024
  %1142 = vst.msk [vmem:[%s12] sm:$0x3] %vm1141, %v1140
  // Predicated region
  $region50: #{forward.3} parent=0 // pred_check
    _
  $region51: #{forward.3} parent=0 // pred_check_branch
    %1144 = sbr.rel (0) target = $region53
  $region52: #{forward.3} parent=0 // pred_region
    _
  $region53: #{forward.3} parent=0 // pred_fallthru
    _
  // Predicated region
  $region54: #{forward.3} parent=0 // pred_check
    _
  $region55: #{forward.3} parent=0 // pred_check_branch
    %1146 = sbr.rel (0) target = $region57
  $region56: #{forward.3} parent=0 // pred_region
    _
  $region57: #{forward.3} parent=0 // pred_fallthru
    _

</llo_original>
